<compile_context>
chip_gen: v7x
topology: tpu7x:2x2x1
jax: 0.10.0
libtpu: 0.0.40
codegen_flags: <defaults>
</compile_context>

<pallas_src>
import jax
import jax.numpy as jnp
from jax.experimental import pallas as pl
from jax.experimental.pallas import tpu as pltpu

EPS = 1e-5


def _fused_kernel(x_ref, w13_ref, b13_ref, w2_ref, b2_ref,
                  gnp_ref, grp_ref, grpT_ref, o_ref):
    # x_ref block: (1, Cin, S) for one batch element, channels-major.
    x = x_ref[0]                                    # (Cin, S) f32

    C = grp_ref.shape[0]                            # 128 out channels
    G = grpT_ref.shape[0]                           # 32 groups
    S = x.shape[1]                                  # H*W
    inv_cnt = 1.0 / float(S * (C // G))

    # Fused first layer: rows [:C] are conv, rows [C:] are conv3 (pre-ReLU).
    y = jnp.dot(w13_ref[...], x,
                preferred_element_type=jnp.float32) + b13_ref[...]   # (2C, S)
    conv = y[:C, :]                                 # (C, S)
    conv3 = jnp.maximum(y[C:, :], 0.0)              # (C, S) relu(conv3(x))

    # GroupNorm(32, C) statistics for this sample.
    s1 = jnp.sum(conv, axis=1, keepdims=True)             # (C, 1)
    s2 = jnp.sum(conv * conv, axis=1, keepdims=True)      # (C, 1)
    # one tiny matmul for BOTH group sums: (G,C) @ (C,2) -> (G,2)
    gs = jnp.dot(grpT_ref[...], jnp.concatenate([s1, s2], axis=1),
                 preferred_element_type=jnp.float32)
    mean_g = gs[:, 0:1] * inv_cnt                          # (G, 1)
    var_g = gs[:, 1:2] * inv_cnt - mean_g * mean_g
    # clamp: single-pass variance can go slightly negative numerically
    inv_g = jax.lax.rsqrt(jnp.maximum(var_g, 0.0) + EPS)   # (G, 1)  EUP rsqrt
    # one tiny matmul to broadcast both stats back per channel: (C,G)@(G,2)
    stats_c = jnp.dot(grp_ref[...], jnp.concatenate([mean_g, inv_g], axis=1),
                      preferred_element_type=jnp.float32)  # (C, 2)
    mean_c = stats_c[:, 0:1]
    inv_c = stats_c[:, 1:2]

    # fold GroupNorm affine (gamma/beta) into the per-channel stats
    gamma_c = gnp_ref[:, 0:1]
    beta_c = gnp_ref[:, 1:2]
    scale_c = inv_c * gamma_c                               # (C, 1)
    shift_c = beta_c - mean_c * scale_c                     # (C, 1)

    # attn_weights = relu(group_norm(conv) + relu(conv3(x)))
    a = jnp.maximum(conv * scale_c + shift_c + conv3, 0.0)  # (C, S)

    # out = Conv2d(128, 128, 1)(attn_weights)
    o_ref[0] = jnp.dot(w2_ref[...], a,
                       preferred_element_type=jnp.float32) + b2_ref[...]


@jax.jit
def fused_forward(x_nchw, w1, b1, w3, b3, w2, b2, gamma, beta):
    """x_nchw: (N, 64, H, W) f32.  Returns (N, 128, H, W) f32."""
    N, Cin, H, W = x_nchw.shape
    S = H * W
    Cout = w1.shape[0]       # 128
    G = 32

    # NCHW -> (N, Cin, S): channels-major, pure reshape (no data movement).
    x = x_nchw.reshape(N, Cin, S)

    # 1x1 conv weights in channels-major matmul form.
    w1m = w1.reshape(Cout, Cin)
    w3m = w3.reshape(Cout, Cin)
    w13 = jnp.concatenate([w1m, w3m], axis=0)               # (2*Cout, Cin)
    b13 = jnp.concatenate([b1, b3], axis=0).reshape(2 * Cout, 1)
    w2m = w2.reshape(Cout, Cout)
    b2c = b2.reshape(Cout, 1)
    gnp = jnp.stack([gamma, beta], axis=1)                   # (Cout, 2)

    # group assignment matrix: grp[c, g] = 1 if channel c belongs to group g
    ch = jnp.arange(Cout)
    grp = (ch[:, None] // (Cout // G) == jnp.arange(G)[None, :]).astype(
        jnp.float32)                                          # (Cout, G)
    grpT = grp.T                                              # (G, Cout)

    full2d = lambda shape: pl.BlockSpec(shape, lambda n: (0, 0))

    out = pl.pallas_call(
        _fused_kernel,
        out_shape=jax.ShapeDtypeStruct((N, Cout, S), jnp.float32),
        grid_spec=pltpu.PrefetchScalarGridSpec(
            num_scalar_prefetch=0,
            grid=(N,),
            in_specs=[
                pl.BlockSpec((1, Cin, S), lambda n: (n, 0, 0)),   # x
                full2d((2 * Cout, Cin)),   # w13 (stacked conv / conv3 weights)
                full2d((2 * Cout, 1)),     # b13
                full2d((Cout, Cout)),      # w2
                full2d((Cout, 1)),         # b2
                full2d((Cout, 2)),         # gamma/beta packed
                full2d((Cout, G)),         # grp   (channel -> group one-hot)
                full2d((G, Cout)),         # grpT
            ],
            out_specs=pl.BlockSpec((1, Cout, S), lambda n: (n, 0, 0)),
        ),
        compiler_params=pltpu.CompilerParams(
            dimension_semantics=("parallel",)),
    )(x, w13, b13, w2m, b2c, gnp, grp, grpT)

    # (N, Cout, S) -> NCHW: pure reshape, free.
    return out.reshape(N, Cout, H, W)


def reference_forward(x, w1, b1, w3, b3, w2, b2, gamma, beta):
    """Pure-JAX reference matching the PyTorch module semantics (NCHW)."""
    def conv1x1(inp, w, b):
        y = jnp.einsum('nchw,oc->nohw', inp, w.reshape(w.shape[0], w.shape[1]))
        return y + b[None, :, None, None]

    conv = conv1x1(x, w1, b1)
    conv3 = jax.nn.relu(conv1x1(x, w3, b3))
    N, C, H, W = conv.shape
    G = 32
    g = conv.reshape(N, G, C // G, H, W)
    mean = g.mean(axis=(2, 3, 4), keepdims=True)
    var = g.var(axis=(2, 3, 4), keepdims=True)
    gn = ((g - mean) / jnp.sqrt(var + EPS)).reshape(N, C, H, W)
    gn = gn * gamma[None, :, None, None] + beta[None, :, None, None]
    a = jax.nn.relu(gn + conv3)
    return conv1x1(a, w2, b2)


if __name__ == "__main__":
    key = jax.random.PRNGKey(0)
    ks = jax.random.split(key, 10)

    N, Cin, Cout, H, W = 2, 64, 128, 16, 16

    # deterministic parameter init (uniform, PyTorch-like scale)
    def u(k, shape, fan_in):
        bound = 1.0 / jnp.sqrt(fan_in)
        return jax.random.uniform(k, shape, jnp.float32, -bound, bound)

    w1 = u(ks[0], (Cout, Cin, 1, 1), Cin)
    b1 = u(ks[1], (Cout,), Cin)
    w3 = u(ks[2], (Cout, Cin, 1, 1), Cin)
    b3 = u(ks[3], (Cout,), Cin)
    w2 = u(ks[4], (Cout, Cout, 1, 1), Cout)
    b2 = u(ks[5], (Cout,), Cout)
    gamma = jnp.ones((Cout,), jnp.float32)   # GroupNorm affine defaults
    beta = jnp.zeros((Cout,), jnp.float32)

    x = jax.random.normal(ks[6], (N, Cin, H, W), jnp.float32)

    out = fused_forward(x, w1, b1, w3, b3, w2, b2, gamma, beta)
    out = jax.block_until_ready(out)

    ref = reference_forward(x, w1, b1, w3, b3, w2, b2, gamma, beta)
    assert out.shape == (N, Cout, H, W)
    assert jnp.allclose(out, ref, atol=1e-4, rtol=1e-4), "mismatch vs reference"

    print("KERNEL_OK")
</pallas_src>

<mosaic_0001>
module attributes {stable_mosaic.version = 11 : i64} {
  func.func @_fused_kernel(%arg0: i32, %arg1: memref<1x64x256xf32, #tpu.memory_space<vmem>>, %arg2: memref<256x64xf32, #tpu.memory_space<vmem>>, %arg3: memref<256x1xf32, #tpu.memory_space<vmem>>, %arg4: memref<128x128xf32, #tpu.memory_space<vmem>>, %arg5: memref<128x1xf32, #tpu.memory_space<vmem>>, %arg6: memref<128x2xf32, #tpu.memory_space<vmem>>, %arg7: memref<128x32xf32, #tpu.memory_space<vmem>>, %arg8: memref<32x128xf32, #tpu.memory_space<vmem>>, %arg9: memref<1x128x256xf32, #tpu.memory_space<vmem>>) attributes {dimension_semantics = [#tpu.dimension_semantics<parallel>], iteration_bounds = array<i64: 2>, scalar_prefetch = 0 : i64, scratch_operands = 0 : i64, tpu.core_type = #tpu.core_type<tc>, window_params = [{transform_indices = @transform_0, window_bounds = array<i64: 1, 64, 256>}, {pipeline_mode = #tpu.pipeline_mode<synchronous>, transform_indices = @transform_1, window_bounds = array<i64: 256, 64>}, {pipeline_mode = #tpu.pipeline_mode<synchronous>, transform_indices = @transform_2, window_bounds = array<i64: 256, 1>}, {pipeline_mode = #tpu.pipeline_mode<synchronous>, transform_indices = @transform_3, window_bounds = array<i64: 128, 128>}, {pipeline_mode = #tpu.pipeline_mode<synchronous>, transform_indices = @transform_4, window_bounds = array<i64: 128, 1>}, {pipeline_mode = #tpu.pipeline_mode<synchronous>, transform_indices = @transform_5, window_bounds = array<i64: 128, 2>}, {pipeline_mode = #tpu.pipeline_mode<synchronous>, transform_indices = @transform_6, window_bounds = array<i64: 128, 32>}, {pipeline_mode = #tpu.pipeline_mode<synchronous>, transform_indices = @transform_7, window_bounds = array<i64: 32, 128>}, {transform_indices = @transform_8, window_bounds = array<i64: 1, 128, 256>}]} {
    %c0 = arith.constant 0 : index
    %c0_0 = arith.constant 0 : index
    %c0_1 = arith.constant 0 : index
    %0 = vector.load %arg1[%c0, %c0_0, %c0_1] : memref<1x64x256xf32, #tpu.memory_space<vmem>>, vector<1x64x256xf32>
    %1 = vector.shape_cast %0 : vector<1x64x256xf32> to vector<64x256xf32>
    %c0_2 = arith.constant 0 : index
    %c0_3 = arith.constant 0 : index
    %2 = vector.load %arg2[%c0_2, %c0_3] : memref<256x64xf32, #tpu.memory_space<vmem>>, vector<256x64xf32>
    %cst = arith.constant dense<0.000000e+00> : vector<256x256xf32>
    %3 = tpu.matmul %2, %1, %cst {dimension_numbers = #tpu.dot_dimension_numbers<[1], [0], [0], [1], [0, 0, 1, 1], [], []>} : vector<256x64xf32>, vector<64x256xf32>, vector<256x256xf32> -> vector<256x256xf32>
    %c0_4 = arith.constant 0 : index
    %c0_5 = arith.constant 0 : index
    %4 = vector.load %arg3[%c0_4, %c0_5] : memref<256x1xf32, #tpu.memory_space<vmem>>, vector<256x1xf32>
    %5 = vector.broadcast %4 : vector<256x1xf32> to vector<256x256xf32>
    %6 = arith.addf %3, %5 : vector<256x256xf32>
    %7 = vector.extract_strided_slice %6 {offsets = [0, 0], sizes = [128, 256], strides = [1, 1]} : vector<256x256xf32> to vector<128x256xf32>
    %8 = vector.extract_strided_slice %6 {offsets = [128, 0], sizes = [128, 256], strides = [1, 1]} : vector<256x256xf32> to vector<128x256xf32>
    %cst_6 = arith.constant 0.000000e+00 : f32
    %9 = vector.broadcast %cst_6 : f32 to vector<128x256xf32>
    %10 = arith.maximumf %8, %9 : vector<128x256xf32>
    %cst_7 = arith.constant dense<0.000000e+00> : vector<128xf32>
    %11 = vector.multi_reduction <add>, %7, %cst_7 [1] : vector<128x256xf32> to vector<128xf32>
    %12 = vector.shape_cast %11 : vector<128xf32> to vector<128x1xf32>
    %13 = arith.mulf %7, %7 : vector<128x256xf32>
    %cst_8 = arith.constant dense<0.000000e+00> : vector<128xf32>
    %14 = vector.multi_reduction <add>, %13, %cst_8 [1] : vector<128x256xf32> to vector<128xf32>
    %15 = vector.shape_cast %14 : vector<128xf32> to vector<128x1xf32>
    %c0_9 = arith.constant 0 : index
    %c0_10 = arith.constant 0 : index
    %16 = vector.load %arg8[%c0_9, %c0_10] : memref<32x128xf32, #tpu.memory_space<vmem>>, vector<32x128xf32>
    %17 = tpu.concatenate %12, %15 in 1 : vector<128x1xf32>, vector<128x1xf32> -> vector<128x2xf32>
    %cst_11 = arith.constant dense<0.000000e+00> : vector<32x2xf32>
    %18 = tpu.matmul %16, %17, %cst_11 {dimension_numbers = #tpu.dot_dimension_numbers<[1], [0], [0], [1], [0, 0, 1, 1], [], []>} : vector<32x128xf32>, vector<128x2xf32>, vector<32x2xf32> -> vector<32x2xf32>
    %19 = vector.extract_strided_slice %18 {offsets = [0, 0], sizes = [32, 1], strides = [1, 1]} : vector<32x2xf32> to vector<32x1xf32>
    %cst_12 = arith.constant 9.765625E-4 : f32
    %20 = vector.broadcast %cst_12 : f32 to vector<32x1xf32>
    %21 = arith.mulf %19, %20 : vector<32x1xf32>
    %22 = vector.extract_strided_slice %18 {offsets = [0, 1], sizes = [32, 1], strides = [1, 1]} : vector<32x2xf32> to vector<32x1xf32>
    %cst_13 = arith.constant 9.765625E-4 : f32
    %23 = vector.broadcast %cst_13 : f32 to vector<32x1xf32>
    %24 = arith.mulf %22, %23 : vector<32x1xf32>
    %25 = arith.mulf %21, %21 : vector<32x1xf32>
    %26 = arith.subf %24, %25 : vector<32x1xf32>
    %cst_14 = arith.constant 0.000000e+00 : f32
    %27 = vector.broadcast %cst_14 : f32 to vector<32x1xf32>
    %28 = arith.maximumf %26, %27 : vector<32x1xf32>
    %cst_15 = arith.constant 9.99999974E-6 : f32
    %29 = vector.broadcast %cst_15 : f32 to vector<32x1xf32>
    %30 = arith.addf %28, %29 : vector<32x1xf32>
    %31 = math.rsqrt %30 : vector<32x1xf32>
    %c0_16 = arith.constant 0 : index
    %c0_17 = arith.constant 0 : index
    %32 = vector.load %arg7[%c0_16, %c0_17] : memref<128x32xf32, #tpu.memory_space<vmem>>, vector<128x32xf32>
    %33 = tpu.concatenate %21, %31 in 1 : vector<32x1xf32>, vector<32x1xf32> -> vector<32x2xf32>
    %cst_18 = arith.constant dense<0.000000e+00> : vector<128x2xf32>
    %34 = tpu.matmul %32, %33, %cst_18 {dimension_numbers = #tpu.dot_dimension_numbers<[1], [0], [0], [1], [0, 0, 1, 1], [], []>} : vector<128x32xf32>, vector<32x2xf32>, vector<128x2xf32> -> vector<128x2xf32>
    %35 = vector.extract_strided_slice %34 {offsets = [0, 0], sizes = [128, 1], strides = [1, 1]} : vector<128x2xf32> to vector<128x1xf32>
    %36 = vector.extract_strided_slice %34 {offsets = [0, 1], sizes = [128, 1], strides = [1, 1]} : vector<128x2xf32> to vector<128x1xf32>
    %c0_19 = arith.constant 0 : index
    %c0_20 = arith.constant 0 : index
    %37 = vector.load %arg6[%c0_19, %c0_20] : memref<128x2xf32, #tpu.memory_space<vmem>>, vector<128x1xf32>
    %c0_21 = arith.constant 0 : index
    %c1 = arith.constant 1 : index
    %38 = vector.load %arg6[%c0_21, %c1] : memref<128x2xf32, #tpu.memory_space<vmem>>, vector<128x1xf32>
    %39 = arith.mulf %36, %37 : vector<128x1xf32>
    %40 = arith.mulf %35, %39 : vector<128x1xf32>
    %41 = arith.subf %38, %40 : vector<128x1xf32>
    %42 = vector.broadcast %39 : vector<128x1xf32> to vector<128x256xf32>
    %43 = arith.mulf %7, %42 : vector<128x256xf32>
    %44 = vector.broadcast %41 : vector<128x1xf32> to vector<128x256xf32>
    %45 = arith.addf %43, %44 : vector<128x256xf32>
    %46 = arith.addf %45, %10 : vector<128x256xf32>
    %cst_22 = arith.constant 0.000000e+00 : f32
    %47 = vector.broadcast %cst_22 : f32 to vector<128x256xf32>
    %48 = arith.maximumf %46, %47 : vector<128x256xf32>
    %c0_23 = arith.constant 0 : index
    %c0_24 = arith.constant 0 : index
    %49 = vector.load %arg4[%c0_23, %c0_24] : memref<128x128xf32, #tpu.memory_space<vmem>>, vector<128x128xf32>
    %cst_25 = arith.constant dense<0.000000e+00> : vector<128x256xf32>
    %50 = tpu.matmul %49, %48, %cst_25 {dimension_numbers = #tpu.dot_dimension_numbers<[1], [0], [0], [1], [0, 0, 1, 1], [], []>} : vector<128x128xf32>, vector<128x256xf32>, vector<128x256xf32> -> vector<128x256xf32>
    %c0_26 = arith.constant 0 : index
    %c0_27 = arith.constant 0 : index
    %51 = vector.load %arg5[%c0_26, %c0_27] : memref<128x1xf32, #tpu.memory_space<vmem>>, vector<128x1xf32>
    %52 = vector.broadcast %51 : vector<128x1xf32> to vector<128x256xf32>
    %53 = arith.addf %50, %52 : vector<128x256xf32>
    %c0_28 = arith.constant 0 : index
    %c0_29 = arith.constant 0 : index
    %c0_30 = arith.constant 0 : index
    %54 = vector.load %arg9[%c0_28, %c0_29, %c0_30] : memref<1x128x256xf32, #tpu.memory_space<vmem>>, vector<1x128x256xf32>
    %55 = vector.shape_cast %54 : vector<1x128x256xf32> to vector<128x256xf32>
    %56 = vector.shape_cast %53 : vector<128x256xf32> to vector<1x128x256xf32>
    tpu.vector_store %arg9[%c0_28, %c0_29, %c0_30], %56 {strides = array<i32>} : memref<1x128x256xf32, #tpu.memory_space<vmem>>, vector<1x128x256xf32>,
    return
  }
  func.func @transform_0(%arg0: i32) -> (i32, i32, i32) {
    %c0_i32 = arith.constant 0 : i32
    %c0_i32_0 = arith.constant 0 : i32
    %c0_i32_1 = arith.constant 0 : i32
    return %arg0, %c0_i32, %c0_i32_0 : i32, i32, i32
  }
  func.func @transform_1(%arg0: i32) -> (i32, i32) {
    %c0_i32 = arith.constant 0 : i32
    %c0_i32_0 = arith.constant 0 : i32
    %c0_i32_1 = arith.constant 0 : i32
    return %c0_i32, %c0_i32_0 : i32, i32
  }
  func.func @transform_2(%arg0: i32) -> (i32, i32) {
    %c0_i32 = arith.constant 0 : i32
    %c0_i32_0 = arith.constant 0 : i32
    %c0_i32_1 = arith.constant 0 : i32
    return %c0_i32, %c0_i32_0 : i32, i32
  }
  func.func @transform_3(%arg0: i32) -> (i32, i32) {
    %c0_i32 = arith.constant 0 : i32
    %c0_i32_0 = arith.constant 0 : i32
    %c0_i32_1 = arith.constant 0 : i32
    return %c0_i32, %c0_i32_0 : i32, i32
  }
  func.func @transform_4(%arg0: i32) -> (i32, i32) {
    %c0_i32 = arith.constant 0 : i32
    %c0_i32_0 = arith.constant 0 : i32
    %c0_i32_1 = arith.constant 0 : i32
    return %c0_i32, %c0_i32_0 : i32, i32
  }
  func.func @transform_5(%arg0: i32) -> (i32, i32) {
    %c0_i32 = arith.constant 0 : i32
    %c0_i32_0 = arith.constant 0 : i32
    %c0_i32_1 = arith.constant 0 : i32
    return %c0_i32, %c0_i32_0 : i32, i32
  }
  func.func @transform_6(%arg0: i32) -> (i32, i32) {
    %c0_i32 = arith.constant 0 : i32
    %c0_i32_0 = arith.constant 0 : i32
    %c0_i32_1 = arith.constant 0 : i32
    return %c0_i32, %c0_i32_0 : i32, i32
  }
  func.func @transform_7(%arg0: i32) -> (i32, i32) {
    %c0_i32 = arith.constant 0 : i32
    %c0_i32_0 = arith.constant 0 : i32
    %c0_i32_1 = arith.constant 0 : i32
    return %c0_i32, %c0_i32_0 : i32, i32
  }
  func.func @transform_8(%arg0: i32) -> (i32, i32, i32) {
    %c0_i32 = arith.constant 0 : i32
    %c0_i32_0 = arith.constant 0 : i32
    %c0_i32_1 = arith.constant 0 : i32
    return %arg0, %c0_i32, %c0_i32_0 : i32, i32, i32
  }
}

</mosaic_0001>

<llo_original>
// kernel: fused_forward.1
$region0: #{fused_forward.1}
  #allocation0 [shape = 'u32[]', space=smem, size = 0x4, offset = 0x4, fixed_abs, tag = 'smem constant byte address 0x4 - core index']
  #allocation1 [shape = 'u32[144,128]{1,0:T(1,128)}', space=vmem, size = 0x12000, scoped, tag = 'internal scratch']
  %s0 = inlined_call_operand.vmem [shape: f32[2,64,256], index: 0, kind: input, shape index: {}]
  %s1 = inlined_call_operand.vmem [shape: f32[256,64], index: 1, kind: input, shape index: {}]
  %s2 = inlined_call_operand.vmem [shape: f32[256,1], index: 2, kind: input, shape index: {}]
  %s3 = inlined_call_operand.vmem [shape: f32[128,128], index: 3, kind: input, shape index: {}]
  %s4 = inlined_call_operand.vmem [shape: f32[128,1], index: 4, kind: input, shape index: {}]
  %s5 = inlined_call_operand.vmem [shape: f32[128,2], index: 5, kind: input, shape index: {}]
  %s6 = inlined_call_operand.vmem [shape: f32[128,32], index: 6, kind: input, shape index: {}]
  %s7 = inlined_call_operand.vmem [shape: f32[32,128], index: 7, kind: input, shape index: {}]
  %s8 = inlined_call_operand.vmem [shape: f32[2,128,256], index: 8, kind: output, shape index: {}]
  %s9 = sld [smem:[#allocation0]]
  $region65: #{fused_forward.1} parent=0
    _
  %s11 = ssub.s32 1, %s9
  %s12 = scalar_select 0, %s11, %s9
  loop: start=0, step=1, limit=4
  $region2: #{fused_forward.1} parent=0 // loop_pre_header
    _
  $region3: #{fused_forward.1} parent=0 // loop_header
    %s14 = sphi 0, %s18
    %p15 = scmp.ge.s32.totalorder %s14, 4
    %s24 = sphi 0, %s26
    %s27 = sphi 0, %s24
    %s28 = sphi 0, %s27
    %s44 = sphi 0, %s28
    %s48 = sphi 0, %s48
    %s50 = sphi 0, %s48
    %s51 = sphi 0, %s50
    %s65 = sphi 0, %s51
    %s69 = sphi 0, %s69
    %s71 = sphi 0, %s69
    %s72 = sphi 0, %s71
    %s86 = sphi 0, %s72
    %s90 = sphi 0, %s90
    %s92 = sphi 0, %s90
    %s93 = sphi 0, %s92
    %s107 = sphi 0, %s93
    %s111 = sphi 0, %s111
    %s113 = sphi 0, %s111
    %s114 = sphi 0, %s113
    %s128 = sphi 0, %s114
    %s132 = sphi 0, %s132
    %s134 = sphi 0, %s132
    %s135 = sphi 0, %s134
    %s149 = sphi 0, %s135
    %s153 = sphi 0, %s153
    %s155 = sphi 0, %s153
    %s156 = sphi 0, %s155
    %s170 = sphi 0, %s156
    %s174 = sphi 0, %s174
    %s176 = sphi 0, %s174
    %s177 = sphi 0, %s176
    %s191 = sphi 0, %s177
    %s197 = sphi 0, %s199
    %s200 = sphi 0, %s197
    %s201 = sphi 0, %s200
    %s217 = sphi 0, %s201
  $region4: #{fused_forward.1} parent=0 // loop_header_branch
    %17 = sbr.rel (%p15) target = $region8
  $region5: #{fused_forward.1} parent=0 // loop_body
    %s19 = ssub.s32 %s14, 1
    %s20 = ssub.s32 %s14, 2
    %s21 = sadd.s32 %s14, 1
    %s22 = ssub.s32 %s14, %s21
    %p23 = scmp.eq.s32.totalorder %s22, 0
    %s25 = sadd.s32 %s24, 1
    %s26 = scalar_select %p23, %s24, %s25
    %p29 = pneg %p23
    %p30 = scmp.eq.s32.totalorder %s14, 1
    %p31 = por %p29, %p30
    %p32 = scmp.ne.s32.totalorder %s24, %s27
    %p33 = scmp.eq.s32.totalorder %s14, 0
    %p34 = por %p32, %p33
    %p35 = scmp.ne.s32.totalorder %s24, %s27
    %p36 = scmp.eq.s32.totalorder %s19, 1
    %p37 = por %p35, %p36
    %p38 = scmp.ne.s32.totalorder %s27, %s28
    %p39 = scmp.eq.s32.totalorder %s19, 0
    %p40 = por %p38, %p39
    %p41 = scmp.ne.s32.totalorder %s27, %s28
    %p42 = scmp.eq.s32.totalorder %s20, 1
    %p43 = por %p41, %p42
    %p45 = scmp.ne.s32.totalorder %s28, %s44
    %p46 = scmp.eq.s32.totalorder %s20, 0
    %p47 = por %p45, %p46
    %s49 = sadd.s32 %s48, 1
    %p52 = scmp.eq.s32.totalorder %s14, 1
    %p53 = scmp.ne.s32.totalorder %s48, %s50
    %p54 = scmp.eq.s32.totalorder %s14, 0
    %p55 = por %p53, %p54
    %p56 = scmp.ne.s32.totalorder %s48, %s50
    %p57 = scmp.eq.s32.totalorder %s19, 1
    %p58 = por %p56, %p57
    %p59 = scmp.ne.s32.totalorder %s50, %s51
    %p60 = scmp.eq.s32.totalorder %s19, 0
    %p61 = por %p59, %p60
    %p62 = scmp.ne.s32.totalorder %s50, %s51
    %p63 = scmp.eq.s32.totalorder %s20, 1
    %p64 = por %p62, %p63
    %p66 = scmp.ne.s32.totalorder %s51, %s65
    %p67 = scmp.eq.s32.totalorder %s20, 0
    %p68 = por %p66, %p67
    %s70 = sadd.s32 %s69, 1
    %p73 = scmp.eq.s32.totalorder %s14, 1
    %p74 = scmp.ne.s32.totalorder %s69, %s71
    %p75 = scmp.eq.s32.totalorder %s14, 0
    %p76 = por %p74, %p75
    %p77 = scmp.ne.s32.totalorder %s69, %s71
    %p78 = scmp.eq.s32.totalorder %s19, 1
    %p79 = por %p77, %p78
    %p80 = scmp.ne.s32.totalorder %s71, %s72
    %p81 = scmp.eq.s32.totalorder %s19, 0
    %p82 = por %p80, %p81
    %p83 = scmp.ne.s32.totalorder %s71, %s72
    %p84 = scmp.eq.s32.totalorder %s20, 1
    %p85 = por %p83, %p84
    %p87 = scmp.ne.s32.totalorder %s72, %s86
    %p88 = scmp.eq.s32.totalorder %s20, 0
    %p89 = por %p87, %p88
    %s91 = sadd.s32 %s90, 1
    %p94 = scmp.eq.s32.totalorder %s14, 1
    %p95 = scmp.ne.s32.totalorder %s90, %s92
    %p96 = scmp.eq.s32.totalorder %s14, 0
    %p97 = por %p95, %p96
    %p98 = scmp.ne.s32.totalorder %s90, %s92
    %p99 = scmp.eq.s32.totalorder %s19, 1
    %p100 = por %p98, %p99
    %p101 = scmp.ne.s32.totalorder %s92, %s93
    %p102 = scmp.eq.s32.totalorder %s19, 0
    %p103 = por %p101, %p102
    %p104 = scmp.ne.s32.totalorder %s92, %s93
    %p105 = scmp.eq.s32.totalorder %s20, 1
    %p106 = por %p104, %p105
    %p108 = scmp.ne.s32.totalorder %s93, %s107
    %p109 = scmp.eq.s32.totalorder %s20, 0
    %p110 = por %p108, %p109
    %s112 = sadd.s32 %s111, 1
    %p115 = scmp.eq.s32.totalorder %s14, 1
    %p116 = scmp.ne.s32.totalorder %s111, %s113
    %p117 = scmp.eq.s32.totalorder %s14, 0
    %p118 = por %p116, %p117
    %p119 = scmp.ne.s32.totalorder %s111, %s113
    %p120 = scmp.eq.s32.totalorder %s19, 1
    %p121 = por %p119, %p120
    %p122 = scmp.ne.s32.totalorder %s113, %s114
    %p123 = scmp.eq.s32.totalorder %s19, 0
    %p124 = por %p122, %p123
    %p125 = scmp.ne.s32.totalorder %s113, %s114
    %p126 = scmp.eq.s32.totalorder %s20, 1
    %p127 = por %p125, %p126
    %p129 = scmp.ne.s32.totalorder %s114, %s128
    %p130 = scmp.eq.s32.totalorder %s20, 0
    %p131 = por %p129, %p130
    %s133 = sadd.s32 %s132, 1
    %p136 = scmp.eq.s32.totalorder %s14, 1
    %p137 = scmp.ne.s32.totalorder %s132, %s134
    %p138 = scmp.eq.s32.totalorder %s14, 0
    %p139 = por %p137, %p138
    %p140 = scmp.ne.s32.totalorder %s132, %s134
    %p141 = scmp.eq.s32.totalorder %s19, 1
    %p142 = por %p140, %p141
    %p143 = scmp.ne.s32.totalorder %s134, %s135
    %p144 = scmp.eq.s32.totalorder %s19, 0
    %p145 = por %p143, %p144
    %p146 = scmp.ne.s32.totalorder %s134, %s135
    %p147 = scmp.eq.s32.totalorder %s20, 1
    %p148 = por %p146, %p147
    %p150 = scmp.ne.s32.totalorder %s135, %s149
    %p151 = scmp.eq.s32.totalorder %s20, 0
    %p152 = por %p150, %p151
    %s154 = sadd.s32 %s153, 1
    %p157 = scmp.eq.s32.totalorder %s14, 1
    %p158 = scmp.ne.s32.totalorder %s153, %s155
    %p159 = scmp.eq.s32.totalorder %s14, 0
    %p160 = por %p158, %p159
    %p161 = scmp.ne.s32.totalorder %s153, %s155
    %p162 = scmp.eq.s32.totalorder %s19, 1
    %p163 = por %p161, %p162
    %p164 = scmp.ne.s32.totalorder %s155, %s156
    %p165 = scmp.eq.s32.totalorder %s19, 0
    %p166 = por %p164, %p165
    %p167 = scmp.ne.s32.totalorder %s155, %s156
    %p168 = scmp.eq.s32.totalorder %s20, 1
    %p169 = por %p167, %p168
    %p171 = scmp.ne.s32.totalorder %s156, %s170
    %p172 = scmp.eq.s32.totalorder %s20, 0
    %p173 = por %p171, %p172
    %s175 = sadd.s32 %s174, 1
    %p178 = scmp.eq.s32.totalorder %s14, 1
    %p179 = scmp.ne.s32.totalorder %s174, %s176
    %p180 = scmp.eq.s32.totalorder %s14, 0
    %p181 = por %p179, %p180
    %p182 = scmp.ne.s32.totalorder %s174, %s176
    %p183 = scmp.eq.s32.totalorder %s19, 1
    %p184 = por %p182, %p183
    %p185 = scmp.ne.s32.totalorder %s176, %s177
    %p186 = scmp.eq.s32.totalorder %s19, 0
    %p187 = por %p185, %p186
    %p188 = scmp.ne.s32.totalorder %s176, %s177
    %p189 = scmp.eq.s32.totalorder %s20, 1
    %p190 = por %p188, %p189
    %p192 = scmp.ne.s32.totalorder %s177, %s191
    %p193 = scmp.eq.s32.totalorder %s20, 0
    %p194 = por %p192, %p193
    %s195 = ssub.s32 %s14, %s21
    %p196 = scmp.eq.s32.totalorder %s195, 0
    %s198 = sadd.s32 %s197, 1
    %s199 = scalar_select %p196, %s197, %s198
    %p202 = pneg %p196
    %p203 = scmp.eq.s32.totalorder %s14, 1
    %p204 = por %p202, %p203
    %p205 = scmp.ne.s32.totalorder %s197, %s200
    %p206 = scmp.eq.s32.totalorder %s14, 0
    %p207 = por %p205, %p206
    %p208 = scmp.ne.s32.totalorder %s197, %s200
    %p209 = scmp.eq.s32.totalorder %s19, 1
    %p210 = por %p208, %p209
    %p211 = scmp.ne.s32.totalorder %s200, %s201
    %p212 = scmp.eq.s32.totalorder %s19, 0
    %p213 = por %p211, %p212
    %p214 = scmp.ne.s32.totalorder %s200, %s201
    %p215 = scmp.eq.s32.totalorder %s20, 1
    %p216 = por %p214, %p215
    %p218 = scmp.ne.s32.totalorder %s201, %s217
    %p219 = scmp.eq.s32.totalorder %s20, 0
    %p220 = por %p218, %p219
    %p221 = scmp.le.s32.totalorder 1, %s14
    %p222 = scmp.lt.s32.totalorder %s14, 3
    %p223 = pnand %p221, %p222
    %p224 = pneg %p223
    // Predicated region
    $region9: #{fused_forward.1} parent=5 // pred_check
      _
    $region10: #{fused_forward.1} parent=5 // pred_check_branch
      %226 = sbr.rel (%p223) target = $region12
    $region11: #{fused_forward.1} parent=5 // pred_region
      %s227 = ssub.s32 %s14, 1
      // Predicated region
      $region13: #{fused_forward.1} parent=11 // pred_check
        %p228 = pneg %p61
      $region14: #{fused_forward.1} parent=11 // pred_check_branch
        %230 = sbr.rel (%p228) target = $region16
      $region15: #{fused_forward.1} parent=11 // pred_region
        _
      $region16: #{fused_forward.1} parent=11 // pred_fallthru
        _
      // Predicated region
      $region17: #{fused_forward.1} parent=11 // pred_check
        %p231 = pneg %p82
      $region18: #{fused_forward.1} parent=11 // pred_check_branch
        %233 = sbr.rel (%p231) target = $region20
      $region19: #{fused_forward.1} parent=11 // pred_region
        _
      $region20: #{fused_forward.1} parent=11 // pred_fallthru
        _
      // Predicated region
      $region21: #{fused_forward.1} parent=11 // pred_check
        %p234 = pneg %p103
      $region22: #{fused_forward.1} parent=11 // pred_check_branch
        %236 = sbr.rel (%p234) target = $region24
      $region23: #{fused_forward.1} parent=11 // pred_region
        _
      $region24: #{fused_forward.1} parent=11 // pred_fallthru
        _
      // Predicated region
      $region25: #{fused_forward.1} parent=11 // pred_check
        %p237 = pneg %p124
      $region26: #{fused_forward.1} parent=11 // pred_check_branch
        %239 = sbr.rel (%p237) target = $region28
      $region27: #{fused_forward.1} parent=11 // pred_region
        _
      $region28: #{fused_forward.1} parent=11 // pred_fallthru
        _
      // Predicated region
      $region29: #{fused_forward.1} parent=11 // pred_check
        %p240 = pneg %p145
      $region30: #{fused_forward.1} parent=11 // pred_check_branch
        %242 = sbr.rel (%p240) target = $region32
      $region31: #{fused_forward.1} parent=11 // pred_region
        _
      $region32: #{fused_forward.1} parent=11 // pred_fallthru
        _
      // Predicated region
      $region33: #{fused_forward.1} parent=11 // pred_check
        %p243 = pneg %p166
      $region34: #{fused_forward.1} parent=11 // pred_check_branch
        %245 = sbr.rel (%p243) target = $region36
      $region35: #{fused_forward.1} parent=11 // pred_region
        _
      $region36: #{fused_forward.1} parent=11 // pred_fallthru
        _
      // Predicated region
      $region37: #{fused_forward.1} parent=11 // pred_check
        %p246 = pneg %p187
      $region38: #{fused_forward.1} parent=11 // pred_check_branch
        %248 = sbr.rel (%p246) target = $region40
      $region39: #{fused_forward.1} parent=11 // pred_region
        _
      $region40: #{fused_forward.1} parent=11 // pred_fallthru
        _
    $region12: #{fused_forward.1} parent=5 // pred_fallthru
      _
    %p249 = scmp.lt.s32.totalorder %s14, 2
    // Predicated region
    $region41: #{fused_forward.1} parent=5 // pred_check
      %p250 = pneg %p249
    $region42: #{fused_forward.1} parent=5 // pred_check_branch
      %252 = sbr.rel (%p250) target = $region44
    $region43: #{fused_forward.1} parent=5 // pred_region
      // Predicated region
      $region45: #{fused_forward.1} parent=43 // pred_check
        %p253 = pneg %p34
      $region46: #{fused_forward.1} parent=43 // pred_check_branch
        %255 = sbr.rel (%p253) target = $region48
      $region47: #{fused_forward.1} parent=43 // pred_region
        %p256 = scmp.lt.s32.totalorder %s14, 1
        %s257 = scalar_select %p256, %s14, 1
        %s258 = smul.addr %s257, 16
        %s259 = smul.addr %s258, 8
        %s260 = scalar_lea.vmem %s0, %s259
      $region48: #{fused_forward.1} parent=43 // pred_fallthru
        _
    $region44: #{fused_forward.1} parent=5 // pred_fallthru
      _
    %p261 = scmp.le.s32.totalorder 1, %s14
    %p262 = scmp.lt.s32.totalorder %s14, 3
    %p263 = pnand %p261, %p262
    %p264 = pneg %p263
    // Predicated region
    $region49: #{fused_forward.1} parent=5 // pred_check
      _
    $region50: #{fused_forward.1} parent=5 // pred_check_branch
      %266 = sbr.rel (%p263) target = $region52
    $region51: #{fused_forward.1} parent=5 // pred_region
      %s267 = ssub.s32 %s14, 1
      %p268 = scmp.lt.s32.totalorder %s19, 1
      %s269 = scalar_select %p268, %s19, 1
      %s270 = smul.addr %s269, 16
      %s271 = smul.addr %s270, 8
      %s272 = scalar_lea.vmem %s0, %s271
      %p273 = pneg %p40
      %p274 = pneg %p37
      %p275 = pneg %p61
      %p276 = pneg %p58
      %p277 = pneg %p82
      %p278 = pneg %p79
      %p279 = pneg %p103
      %p280 = pneg %p100
      %p281 = pneg %p124
      %p282 = pneg %p121
      %p283 = pneg %p145
      %p284 = pneg %p142
      %p285 = pneg %p166
      %p286 = pneg %p163
      %p287 = pneg %p187
      %p288 = pneg %p184
      %p289 = pneg %p213
      %p290 = pneg %p210
      %p291 = scmp.lt.s32.totalorder %s19, 1
      %s292 = scalar_select %p291, %s19, 1
      %s293 = smul.addr %s292, 32
      %s294 = smul.addr %s293, 8
      %s295 = scalar_lea.vmem %s8, %s294
      %p296 = scmp.lt.s32.totalorder %s19, 1
      %s297 = scalar_select %p296, %s19, 1
      %s298 = smul.addr %s297, 16
      %s299 = smul.addr %s298, 8
      %s300 = scalar_lea.vmem %s0, %s299
      %p301 = scmp.lt.s32.totalorder %s19, 1
      %s302 = scalar_select %p301, %s19, 1
      %s303 = smul.addr %s302, 32
      %s304 = smul.addr %s303, 8
      %s305 = scalar_lea.vmem %s8, %s304
      %v306 = vld [vmem:[%s300] sm:$0xff]
      %v307 = vld [vmem:[%s300 + $0x8] sm:$0xff]
      %v308 = vld [vmem:[%s300 + $0x10] sm:$0xff]
      %v309 = vld [vmem:[%s300 + $0x18] sm:$0xff]
      %v310 = vld [vmem:[%s300 + $0x20] sm:$0xff]
      %v311 = vld [vmem:[%s300 + $0x28] sm:$0xff]
      %v312 = vld [vmem:[%s300 + $0x30] sm:$0xff]
      %v313 = vld [vmem:[%s300 + $0x38] sm:$0xff]
      %v314 = vld [vmem:[%s300 + $0x40] sm:$0xff]
      %v315 = vld [vmem:[%s300 + $0x48] sm:$0xff]
      %v316 = vld [vmem:[%s300 + $0x50] sm:$0xff]
      %v317 = vld [vmem:[%s300 + $0x58] sm:$0xff]
      %v318 = vld [vmem:[%s300 + $0x60] sm:$0xff]
      %v319 = vld [vmem:[%s300 + $0x68] sm:$0xff]
      %v320 = vld [vmem:[%s300 + $0x70] sm:$0xff]
      %v321 = vld [vmem:[%s300 + $0x78] sm:$0xff]
      %v322 = vld [vmem:[%s1] sm:$0xff]
      %v323 = vld [vmem:[%s1 + $0x8] sm:$0xff]
      %v324 = vld [vmem:[%s1 + $0x10] sm:$0xff]
      %v325 = vld [vmem:[%s1 + $0x18] sm:$0xff]
      %v326 = vld [vmem:[%s1 + $0x20] sm:$0xff]
      %v327 = vld [vmem:[%s1 + $0x28] sm:$0xff]
      %v328 = vld [vmem:[%s1 + $0x30] sm:$0xff]
      %v329 = vld [vmem:[%s1 + $0x38] sm:$0xff]
      %v330 = vld [vmem:[%s1 + $0x40] sm:$0xff]
      %v331 = vld [vmem:[%s1 + $0x48] sm:$0xff]
      %v332 = vld [vmem:[%s1 + $0x50] sm:$0xff]
      %v333 = vld [vmem:[%s1 + $0x58] sm:$0xff]
      %v334 = vld [vmem:[%s1 + $0x60] sm:$0xff]
      %v335 = vld [vmem:[%s1 + $0x68] sm:$0xff]
      %v336 = vld [vmem:[%s1 + $0x70] sm:$0xff]
      %v337 = vld [vmem:[%s1 + $0x78] sm:$0xff]
      %v338 = vld [vmem:[%s1 + $0x80] sm:$0xff]
      %v339 = vld [vmem:[%s1 + $0x88] sm:$0xff]
      %v340 = vld [vmem:[%s1 + $0x90] sm:$0xff]
      %v341 = vld [vmem:[%s1 + $0x98] sm:$0xff]
      %v342 = vld [vmem:[%s1 + $0xa0] sm:$0xff]
      %v343 = vld [vmem:[%s1 + $0xa8] sm:$0xff]
      %v344 = vld [vmem:[%s1 + $0xb0] sm:$0xff]
      %v345 = vld [vmem:[%s1 + $0xb8] sm:$0xff]
      %v346 = vld [vmem:[%s1 + $0xc0] sm:$0xff]
      %v347 = vld [vmem:[%s1 + $0xc8] sm:$0xff]
      %v348 = vld [vmem:[%s1 + $0xd0] sm:$0xff]
      %v349 = vld [vmem:[%s1 + $0xd8] sm:$0xff]
      %v350 = vld [vmem:[%s1 + $0xe0] sm:$0xff]
      %v351 = vld [vmem:[%s1 + $0xe8] sm:$0xff]
      %v352 = vld [vmem:[%s1 + $0xf0] sm:$0xff]
      %v353 = vld [vmem:[%s1 + $0xf8] sm:$0xff]
      %v354 = vld [vmem:[%s2] sm:$0xff]
      %v355 = vld [vmem:[%s2 + $0x8] sm:$0xff]
      %v356 = vld [vmem:[%s2 + $0x10] sm:$0xff]
      %v357 = vld [vmem:[%s2 + $0x18] sm:$0xff]
      %v358 = vld [vmem:[%s2 + $0x20] sm:$0xff]
      %v359 = vld [vmem:[%s2 + $0x28] sm:$0xff]
      %v360 = vld [vmem:[%s2 + $0x30] sm:$0xff]
      %v361 = vld [vmem:[%s2 + $0x38] sm:$0xff]
      %v362 = vld [vmem:[%s2 + $0x40] sm:$0xff]
      %v363 = vld [vmem:[%s2 + $0x48] sm:$0xff]
      %v364 = vld [vmem:[%s2 + $0x50] sm:$0xff]
      %v365 = vld [vmem:[%s2 + $0x58] sm:$0xff]
      %v366 = vld [vmem:[%s2 + $0x60] sm:$0xff]
      %v367 = vld [vmem:[%s2 + $0x68] sm:$0xff]
      %v368 = vld [vmem:[%s2 + $0x70] sm:$0xff]
      %v369 = vld [vmem:[%s2 + $0x78] sm:$0xff]
      %v370 = vld [vmem:[%s2 + $0x80] sm:$0xff]
      %v371 = vld [vmem:[%s2 + $0x88] sm:$0xff]
      %v372 = vld [vmem:[%s2 + $0x90] sm:$0xff]
      %v373 = vld [vmem:[%s2 + $0x98] sm:$0xff]
      %v374 = vld [vmem:[%s2 + $0xa0] sm:$0xff]
      %v375 = vld [vmem:[%s2 + $0xa8] sm:$0xff]
      %v376 = vld [vmem:[%s2 + $0xb0] sm:$0xff]
      %v377 = vld [vmem:[%s2 + $0xb8] sm:$0xff]
      %v378 = vld [vmem:[%s2 + $0xc0] sm:$0xff]
      %v379 = vld [vmem:[%s2 + $0xc8] sm:$0xff]
      %v380 = vld [vmem:[%s2 + $0xd0] sm:$0xff]
      %v381 = vld [vmem:[%s2 + $0xd8] sm:$0xff]
      %v382 = vld [vmem:[%s2 + $0xe0] sm:$0xff]
      %v383 = vld [vmem:[%s2 + $0xe8] sm:$0xff]
      %v384 = vld [vmem:[%s2 + $0xf0] sm:$0xff]
      %v385 = vld [vmem:[%s2 + $0xf8] sm:$0xff]
      %387 = vset.pattern.permute.xlu0 0
      %388 = vperm.xlu0 %387, %v354
      %v389 = vpop.permute.xlu0 %388
      %392 = vset.pattern.permute.xlu0 0
      %393 = vperm.xlu0 %392, %v355
      %v394 = vpop.permute.xlu0 %393
      %397 = vset.pattern.permute.xlu0 0
      %398 = vperm.xlu0 %397, %v356
      %v399 = vpop.permute.xlu0 %398
      %402 = vset.pattern.permute.xlu0 0
      %403 = vperm.xlu0 %402, %v357
      %v404 = vpop.permute.xlu0 %403
      %407 = vset.pattern.permute.xlu0 0
      %408 = vperm.xlu0 %407, %v358
      %v409 = vpop.permute.xlu0 %408
      %412 = vset.pattern.permute.xlu0 0
      %413 = vperm.xlu0 %412, %v359
      %v414 = vpop.permute.xlu0 %413
      %417 = vset.pattern.permute.xlu0 0
      %418 = vperm.xlu0 %417, %v360
      %v419 = vpop.permute.xlu0 %418
      %422 = vset.pattern.permute.xlu0 0
      %423 = vperm.xlu0 %422, %v361
      %v424 = vpop.permute.xlu0 %423
      %427 = vset.pattern.permute.xlu0 0
      %428 = vperm.xlu0 %427, %v362
      %v429 = vpop.permute.xlu0 %428
      %432 = vset.pattern.permute.xlu0 0
      %433 = vperm.xlu0 %432, %v363
      %v434 = vpop.permute.xlu0 %433
      %437 = vset.pattern.permute.xlu0 0
      %438 = vperm.xlu0 %437, %v364
      %v439 = vpop.permute.xlu0 %438
      %442 = vset.pattern.permute.xlu0 0
      %443 = vperm.xlu0 %442, %v365
      %v444 = vpop.permute.xlu0 %443
      %447 = vset.pattern.permute.xlu0 0
      %448 = vperm.xlu0 %447, %v366
      %v449 = vpop.permute.xlu0 %448
      %452 = vset.pattern.permute.xlu0 0
      %453 = vperm.xlu0 %452, %v367
      %v454 = vpop.permute.xlu0 %453
      %457 = vset.pattern.permute.xlu0 0
      %458 = vperm.xlu0 %457, %v368
      %v459 = vpop.permute.xlu0 %458
      %462 = vset.pattern.permute.xlu0 0
      %463 = vperm.xlu0 %462, %v369
      %v464 = vpop.permute.xlu0 %463
      %467 = vset.pattern.permute.xlu0 0
      %468 = vperm.xlu0 %467, %v370
      %v469 = vpop.permute.xlu0 %468
      %472 = vset.pattern.permute.xlu0 0
      %473 = vperm.xlu0 %472, %v371
      %v474 = vpop.permute.xlu0 %473
      %477 = vset.pattern.permute.xlu0 0
      %478 = vperm.xlu0 %477, %v372
      %v479 = vpop.permute.xlu0 %478
      %482 = vset.pattern.permute.xlu0 0
      %483 = vperm.xlu0 %482, %v373
      %v484 = vpop.permute.xlu0 %483
      %487 = vset.pattern.permute.xlu0 0
      %488 = vperm.xlu0 %487, %v374
      %v489 = vpop.permute.xlu0 %488
      %492 = vset.pattern.permute.xlu0 0
      %493 = vperm.xlu0 %492, %v375
      %v494 = vpop.permute.xlu0 %493
      %497 = vset.pattern.permute.xlu0 0
      %498 = vperm.xlu0 %497, %v376
      %v499 = vpop.permute.xlu0 %498
      %502 = vset.pattern.permute.xlu0 0
      %503 = vperm.xlu0 %502, %v377
      %v504 = vpop.permute.xlu0 %503
      %507 = vset.pattern.permute.xlu0 0
      %508 = vperm.xlu0 %507, %v378
      %v509 = vpop.permute.xlu0 %508
      %512 = vset.pattern.permute.xlu0 0
      %513 = vperm.xlu0 %512, %v379
      %v514 = vpop.permute.xlu0 %513
      %517 = vset.pattern.permute.xlu0 0
      %518 = vperm.xlu0 %517, %v380
      %v519 = vpop.permute.xlu0 %518
      %522 = vset.pattern.permute.xlu0 0
      %523 = vperm.xlu0 %522, %v381
      %v524 = vpop.permute.xlu0 %523
      %527 = vset.pattern.permute.xlu0 0
      %528 = vperm.xlu0 %527, %v382
      %v529 = vpop.permute.xlu0 %528
      %532 = vset.pattern.permute.xlu0 0
      %533 = vperm.xlu0 %532, %v383
      %v534 = vpop.permute.xlu0 %533
      %537 = vset.pattern.permute.xlu0 0
      %538 = vperm.xlu0 %537, %v384
      %v539 = vpop.permute.xlu0 %538
      %542 = vset.pattern.permute.xlu0 0
      %543 = vperm.xlu0 %542, %v385
      %v544 = vpop.permute.xlu0 %543
      %vm546 = vcmask 523264
      %v548 = vsel %vm546, %v322, 0
      %v551 = vsel %vm546, %v323, 0
      %v554 = vsel %vm546, %v324, 0
      %v557 = vsel %vm546, %v325, 0
      %v560 = vsel %vm546, %v326, 0
      %v563 = vsel %vm546, %v327, 0
      %v566 = vsel %vm546, %v328, 0
      %v569 = vsel %vm546, %v329, 0
      %v572 = vsel %vm546, %v330, 0
      %v575 = vsel %vm546, %v331, 0
      %v578 = vsel %vm546, %v332, 0
      %v581 = vsel %vm546, %v333, 0
      %v584 = vsel %vm546, %v334, 0
      %v587 = vsel %vm546, %v335, 0
      %v590 = vsel %vm546, %v336, 0
      %v593 = vsel %vm546, %v337, 0
      %v596 = vsel %vm546, %v338, 0
      %v599 = vsel %vm546, %v339, 0
      %v602 = vsel %vm546, %v340, 0
      %v605 = vsel %vm546, %v341, 0
      %v608 = vsel %vm546, %v342, 0
      %v611 = vsel %vm546, %v343, 0
      %v614 = vsel %vm546, %v344, 0
      %v617 = vsel %vm546, %v345, 0
      %v620 = vsel %vm546, %v346, 0
      %v623 = vsel %vm546, %v347, 0
      %v626 = vsel %vm546, %v348, 0
      %v629 = vsel %vm546, %v349, 0
      %v632 = vsel %vm546, %v350, 0
      %v635 = vsel %vm546, %v351, 0
      %v638 = vsel %vm546, %v352, 0
      %v641 = vsel %vm546, %v353, 0
      %643 = vmatprep.subr.mxu0 %v307
      %644 = vmatpush1.msra.mxu0 %v306
      %645 = vmatprep.subr.mxu0 %v309
      %646 = vmatpush1.msra.mxu0 %v308
      %647 = vmatprep.subr.mxu0 %v311
      %648 = vmatpush1.msra.mxu0 %v310
      %649 = vmatprep.subr.mxu0 %v313
      %650 = vmatpush1.msra.mxu0 %v312
      %651 = vmatprep.subr.mxu0 %v315
      %652 = vmatpush1.msra.mxu0 %v314
      %653 = vmatprep.subr.mxu0 %v317
      %654 = vmatpush1.msra.mxu0 %v316
      %655 = vmatprep.subr.mxu0 %v319
      %656 = vmatpush1.msra.mxu0 %v318
      %657 = vmatprep.subr.mxu0 %v321
      %658 = vmatpush1.msra.mxu0 %v320
      %659 = vmatprep.subr.mxu0 0.0
      %660 = vmatpush1.msra.mxu0 0.0
      %661 = vmatprep.subr.mxu0 0.0
      %662 = vmatpush1.msra.mxu0 0.0
      %663 = vmatprep.subr.mxu0 0.0
      %664 = vmatpush1.msra.mxu0 0.0
      %665 = vmatprep.subr.mxu0 0.0
      %666 = vmatpush1.msra.mxu0 0.0
      %667 = vmatprep.subr.mxu0 0.0
      %668 = vmatpush1.msra.mxu0 0.0
      %669 = vmatprep.subr.mxu0 0.0
      %670 = vmatpush1.msra.mxu0 0.0
      %671 = vmatprep.subr.mxu0 0.0
      %672 = vmatpush1.msra.mxu0 0.0
      %673 = vmatprep.subr.mxu0 0.0
      %674 = vmatpush1.msra.mxu0 0.0
      %675 = vmatprep.subr.mxu0 0.0
      %676 = vmatpush1.msra.mxu0 0.0
      %677 = vmatprep.subr.mxu0 0.0
      %678 = vmatpush1.msra.mxu0 0.0
      %679 = vmatprep.subr.mxu0 0.0
      %680 = vmatpush1.msra.mxu0 0.0
      %681 = vmatprep.subr.mxu0 0.0
      %682 = vmatpush1.msra.mxu0 0.0
      %683 = vmatprep.subr.mxu0 0.0
      %684 = vmatpush1.msra.mxu0 0.0
      %685 = vmatprep.subr.mxu0 0.0
      %686 = vmatpush1.msra.mxu0 0.0
      %687 = vmatprep.subr.mxu0 0.0
      %688 = vmatpush1.msra.mxu0 0.0
      %689 = vmatprep.subr.mxu0 0.0
      %690 = vmatpush1.msra.mxu0 0.0
      %691 = vmatprep.subr.mxu0 0.0
      %692 = vmatpush1.msra.mxu0 0.0
      %693 = vmatprep.subr.mxu0 0.0
      %694 = vmatpush1.msra.mxu0 0.0
      %695 = vmatprep.subr.mxu0 0.0
      %696 = vmatpush1.msra.mxu0 0.0
      %697 = vmatprep.subr.mxu0 0.0
      %698 = vmatpush1.msra.mxu0 0.0
      %699 = vmatprep.subr.mxu0 0.0
      %700 = vmatpush1.msra.mxu0 0.0
      %701 = vmatprep.subr.mxu0 0.0
      %702 = vmatpush1.msra.mxu0 0.0
      %703 = vmatprep.subr.mxu0 0.0
      %704 = vmatpush1.msra.mxu0 0.0
      %705 = vmatprep.subr.mxu0 0.0
      %706 = vmatpush1.msra.mxu0 0.0
      %707 = vmatprep.mubr.f32.mxu0 0.0
      %708 = vmatmul.mubr.f32.gmra.mrb[0].mxu0 %v548
      %v709 = vpop.f32.mrb[0].mxu0
      %v710 = vadd.f32 %v389, %v709
      %v711 = vpop.f32.mrb[0].mxu0
      %v712 = vadd.f32 %v389, %v711
      %713 = vmatprep.mubr.f32.mxu0 0.0
      %714 = vmatmul.mubr.f32.gmra.mrb[0].mxu0 %v551
      %v715 = vpop.f32.mrb[0].mxu0
      %v716 = vadd.f32 %v394, %v715
      %v717 = vpop.f32.mrb[0].mxu0
      %v718 = vadd.f32 %v394, %v717
      %719 = vmatprep.mubr.f32.mxu0 0.0
      %720 = vmatmul.mubr.f32.gmra.mrb[0].mxu0 %v554
      %v721 = vpop.f32.mrb[0].mxu0
      %v722 = vadd.f32 %v399, %v721
      %v723 = vpop.f32.mrb[0].mxu0
      %v724 = vadd.f32 %v399, %v723
      %725 = vmatprep.mubr.f32.mxu0 0.0
      %726 = vmatmul.mubr.f32.gmra.mrb[0].mxu0 %v557
      %v727 = vpop.f32.mrb[0].mxu0
      %v728 = vadd.f32 %v404, %v727
      %v729 = vpop.f32.mrb[0].mxu0
      %v730 = vadd.f32 %v404, %v729
      %731 = vmatprep.mubr.f32.mxu0 0.0
      %732 = vmatmul.mubr.f32.gmra.mrb[0].mxu0 %v560
      %v733 = vpop.f32.mrb[0].mxu0
      %v734 = vadd.f32 %v409, %v733
      %v735 = vpop.f32.mrb[0].mxu0
      %v736 = vadd.f32 %v409, %v735
      %737 = vmatprep.mubr.f32.mxu0 0.0
      %738 = vmatmul.mubr.f32.gmra.mrb[0].mxu0 %v563
      %v739 = vpop.f32.mrb[0].mxu0
      %v740 = vadd.f32 %v414, %v739
      %v741 = vpop.f32.mrb[0].mxu0
      %v742 = vadd.f32 %v414, %v741
      %743 = vmatprep.mubr.f32.mxu0 0.0
      %744 = vmatmul.mubr.f32.gmra.mrb[0].mxu0 %v566
      %v745 = vpop.f32.mrb[0].mxu0
      %v746 = vadd.f32 %v419, %v745
      %v747 = vpop.f32.mrb[0].mxu0
      %v748 = vadd.f32 %v419, %v747
      %749 = vmatprep.mubr.f32.mxu0 0.0
      %750 = vmatmul.mubr.f32.gmra.mrb[0].mxu0 %v569
      %v751 = vpop.f32.mrb[0].mxu0
      %v752 = vadd.f32 %v424, %v751
      %v753 = vpop.f32.mrb[0].mxu0
      %v754 = vadd.f32 %v424, %v753
      %755 = vmatprep.mubr.f32.mxu0 0.0
      %756 = vmatmul.mubr.f32.gmra.mrb[0].mxu0 %v572
      %v757 = vpop.f32.mrb[0].mxu0
      %v758 = vadd.f32 %v429, %v757
      %v759 = vpop.f32.mrb[0].mxu0
      %v760 = vadd.f32 %v429, %v759
      %761 = vmatprep.mubr.f32.mxu0 0.0
      %762 = vmatmul.mubr.f32.gmra.mrb[0].mxu0 %v575
      %v763 = vpop.f32.mrb[0].mxu0
      %v764 = vadd.f32 %v434, %v763
      %v765 = vpop.f32.mrb[0].mxu0
      %v766 = vadd.f32 %v434, %v765
      %767 = vmatprep.mubr.f32.mxu0 0.0
      %768 = vmatmul.mubr.f32.gmra.mrb[0].mxu0 %v578
      %v769 = vpop.f32.mrb[0].mxu0
      %v770 = vadd.f32 %v439, %v769
      %v771 = vpop.f32.mrb[0].mxu0
      %v772 = vadd.f32 %v439, %v771
      %773 = vmatprep.mubr.f32.mxu0 0.0
      %774 = vmatmul.mubr.f32.gmra.mrb[0].mxu0 %v581
      %v775 = vpop.f32.mrb[0].mxu0
      %v776 = vadd.f32 %v444, %v775
      %v777 = vpop.f32.mrb[0].mxu0
      %v778 = vadd.f32 %v444, %v777
      %779 = vmatprep.mubr.f32.mxu0 0.0
      %780 = vmatmul.mubr.f32.gmra.mrb[0].mxu0 %v584
      %v781 = vpop.f32.mrb[0].mxu0
      %v782 = vadd.f32 %v449, %v781
      %v783 = vpop.f32.mrb[0].mxu0
      %v784 = vadd.f32 %v449, %v783
      %785 = vmatprep.mubr.f32.mxu0 0.0
      %786 = vmatmul.mubr.f32.gmra.mrb[0].mxu0 %v587
      %v787 = vpop.f32.mrb[0].mxu0
      %v788 = vadd.f32 %v454, %v787
      %v789 = vpop.f32.mrb[0].mxu0
      %v790 = vadd.f32 %v454, %v789
      %791 = vmatprep.mubr.f32.mxu0 0.0
      %792 = vmatmul.mubr.f32.gmra.mrb[0].mxu0 %v590
      %v793 = vpop.f32.mrb[0].mxu0
      %v794 = vadd.f32 %v459, %v793
      %v795 = vpop.f32.mrb[0].mxu0
      %v796 = vadd.f32 %v459, %v795
      %797 = vmatprep.mubr.f32.mxu0 0.0
      %798 = vmatmul.mubr.f32.gmra.mrb[0].mxu0 %v593
      %v799 = vpop.f32.mrb[0].mxu0
      %v800 = vadd.f32 %v464, %v799
      %v801 = vpop.f32.mrb[0].mxu0
      %v802 = vadd.f32 %v464, %v801
      %803 = vmatprep.mubr.f32.mxu0 0.0
      %804 = vmatmul.mubr.f32.gmra.mrb[0].mxu0 %v596
      %v805 = vpop.f32.mrb[0].mxu0
      %v806 = vadd.f32 %v469, %v805
      %v807 = vpop.f32.mrb[0].mxu0
      %v808 = vadd.f32 %v469, %v807
      %809 = vmatprep.mubr.f32.mxu0 0.0
      %810 = vmatmul.mubr.f32.gmra.mrb[0].mxu0 %v599
      %v811 = vpop.f32.mrb[0].mxu0
      %v812 = vadd.f32 %v474, %v811
      %v813 = vpop.f32.mrb[0].mxu0
      %v814 = vadd.f32 %v474, %v813
      %815 = vmatprep.mubr.f32.mxu0 0.0
      %816 = vmatmul.mubr.f32.gmra.mrb[0].mxu0 %v602
      %v817 = vpop.f32.mrb[0].mxu0
      %v818 = vadd.f32 %v479, %v817
      %v819 = vpop.f32.mrb[0].mxu0
      %v820 = vadd.f32 %v479, %v819
      %821 = vmatprep.mubr.f32.mxu0 0.0
      %822 = vmatmul.mubr.f32.gmra.mrb[0].mxu0 %v605
      %v823 = vpop.f32.mrb[0].mxu0
      %v824 = vadd.f32 %v484, %v823
      %v825 = vpop.f32.mrb[0].mxu0
      %v826 = vadd.f32 %v484, %v825
      %827 = vmatprep.mubr.f32.mxu0 0.0
      %828 = vmatmul.mubr.f32.gmra.mrb[0].mxu0 %v608
      %v829 = vpop.f32.mrb[0].mxu0
      %v830 = vadd.f32 %v489, %v829
      %v831 = vpop.f32.mrb[0].mxu0
      %v832 = vadd.f32 %v489, %v831
      %833 = vmatprep.mubr.f32.mxu0 0.0
      %834 = vmatmul.mubr.f32.gmra.mrb[0].mxu0 %v611
      %v835 = vpop.f32.mrb[0].mxu0
      %v836 = vadd.f32 %v494, %v835
      %v837 = vpop.f32.mrb[0].mxu0
      %v838 = vadd.f32 %v494, %v837
      %839 = vmatprep.mubr.f32.mxu0 0.0
      %840 = vmatmul.mubr.f32.gmra.mrb[0].mxu0 %v614
      %v841 = vpop.f32.mrb[0].mxu0
      %v842 = vadd.f32 %v499, %v841
      %v843 = vpop.f32.mrb[0].mxu0
      %v844 = vadd.f32 %v499, %v843
      %845 = vmatprep.mubr.f32.mxu0 0.0
      %846 = vmatmul.mubr.f32.gmra.mrb[0].mxu0 %v617
      %v847 = vpop.f32.mrb[0].mxu0
      %v848 = vadd.f32 %v504, %v847
      %v849 = vpop.f32.mrb[0].mxu0
      %v850 = vadd.f32 %v504, %v849
      %851 = vmatprep.mubr.f32.mxu0 0.0
      %852 = vmatmul.mubr.f32.gmra.mrb[0].mxu0 %v620
      %v853 = vpop.f32.mrb[0].mxu0
      %v854 = vadd.f32 %v509, %v853
      %v855 = vpop.f32.mrb[0].mxu0
      %v856 = vadd.f32 %v509, %v855
      %857 = vmatprep.mubr.f32.mxu0 0.0
      %858 = vmatmul.mubr.f32.gmra.mrb[0].mxu0 %v623
      %v859 = vpop.f32.mrb[0].mxu0
      %v860 = vadd.f32 %v514, %v859
      %v861 = vpop.f32.mrb[0].mxu0
      %v862 = vadd.f32 %v514, %v861
      %863 = vmatprep.mubr.f32.mxu0 0.0
      %864 = vmatmul.mubr.f32.gmra.mrb[0].mxu0 %v626
      %v865 = vpop.f32.mrb[0].mxu0
      %v866 = vadd.f32 %v519, %v865
      %v867 = vpop.f32.mrb[0].mxu0
      %v868 = vadd.f32 %v519, %v867
      %869 = vmatprep.mubr.f32.mxu0 0.0
      %870 = vmatmul.mubr.f32.gmra.mrb[0].mxu0 %v629
      %v871 = vpop.f32.mrb[0].mxu0
      %v872 = vadd.f32 %v524, %v871
      %v873 = vpop.f32.mrb[0].mxu0
      %v874 = vadd.f32 %v524, %v873
      %875 = vmatprep.mubr.f32.mxu0 0.0
      %876 = vmatmul.mubr.f32.gmra.mrb[0].mxu0 %v632
      %v877 = vpop.f32.mrb[0].mxu0
      %v878 = vadd.f32 %v529, %v877
      %v879 = vpop.f32.mrb[0].mxu0
      %v880 = vadd.f32 %v529, %v879
      %881 = vmatprep.mubr.f32.mxu0 0.0
      %882 = vmatmul.mubr.f32.gmra.mrb[0].mxu0 %v635
      %v883 = vpop.f32.mrb[0].mxu0
      %v884 = vadd.f32 %v534, %v883
      %v885 = vpop.f32.mrb[0].mxu0
      %v886 = vadd.f32 %v534, %v885
      %887 = vmatprep.mubr.f32.mxu0 0.0
      %888 = vmatmul.mubr.f32.gmra.mrb[0].mxu0 %v638
      %v889 = vpop.f32.mrb[0].mxu0
      %v890 = vadd.f32 %v539, %v889
      %v891 = vpop.f32.mrb[0].mxu0
      %v892 = vadd.f32 %v539, %v891
      %893 = vmatprep.mubr.f32.mxu0 0.0
      %894 = vmatmul.mubr.f32.gmra.mrb[0].mxu0 %v641
      %v895 = vpop.f32.mrb[0].mxu0
      %v896 = vadd.f32 %v544, %v895
      %v897 = vpop.f32.mrb[0].mxu0
      %v898 = vadd.f32 %v544, %v897
      %899 = vdwg.mxu0
      %v900 = vmax.f32 %v806, 0.0
      %v901 = vmax.f32 %v808, 0.0
      %v902 = vmax.f32 %v812, 0.0
      %v903 = vmax.f32 %v814, 0.0
      %v904 = vmax.f32 %v818, 0.0
      %v905 = vmax.f32 %v820, 0.0
      %v906 = vmax.f32 %v824, 0.0
      %v907 = vmax.f32 %v826, 0.0
      %v908 = vmax.f32 %v830, 0.0
      %v909 = vmax.f32 %v832, 0.0
      %v910 = vmax.f32 %v836, 0.0
      %v911 = vmax.f32 %v838, 0.0
      %v912 = vmax.f32 %v842, 0.0
      %v913 = vmax.f32 %v844, 0.0
      %v914 = vmax.f32 %v848, 0.0
      %v915 = vmax.f32 %v850, 0.0
      %v916 = vmax.f32 %v854, 0.0
      %v917 = vmax.f32 %v856, 0.0
      %v918 = vmax.f32 %v860, 0.0
      %v919 = vmax.f32 %v862, 0.0
      %v920 = vmax.f32 %v866, 0.0
      %v921 = vmax.f32 %v868, 0.0
      %v922 = vmax.f32 %v872, 0.0
      %v923 = vmax.f32 %v874, 0.0
      %v924 = vmax.f32 %v878, 0.0
      %v925 = vmax.f32 %v880, 0.0
      %v926 = vmax.f32 %v884, 0.0
      %v927 = vmax.f32 %v886, 0.0
      %v928 = vmax.f32 %v890, 0.0
      %v929 = vmax.f32 %v892, 0.0
      %v930 = vmax.f32 %v896, 0.0
      %v931 = vmax.f32 %v898, 0.0
      %v932 = vadd.f32 %v710, %v712
      %933 = vadd.xlane.f32.xlu0 %v932
      %v934 = vpop.xlane.xlu0 %933
      %v935 = vadd.f32 %v716, %v718
      %936 = vadd.xlane.f32.xlu0 %v935
      %v937 = vpop.xlane.xlu0 %936
      %v938 = vadd.f32 %v722, %v724
      %939 = vadd.xlane.f32.xlu0 %v938
      %v940 = vpop.xlane.xlu0 %939
      %v941 = vadd.f32 %v728, %v730
      %942 = vadd.xlane.f32.xlu0 %v941
      %v943 = vpop.xlane.xlu0 %942
      %v944 = vadd.f32 %v734, %v736
      %945 = vadd.xlane.f32.xlu0 %v944
      %v946 = vpop.xlane.xlu0 %945
      %v947 = vadd.f32 %v740, %v742
      %948 = vadd.xlane.f32.xlu0 %v947
      %v949 = vpop.xlane.xlu0 %948
      %v950 = vadd.f32 %v746, %v748
      %951 = vadd.xlane.f32.xlu0 %v950
      %v952 = vpop.xlane.xlu0 %951
      %v953 = vadd.f32 %v752, %v754
      %954 = vadd.xlane.f32.xlu0 %v953
      %v955 = vpop.xlane.xlu0 %954
      %v956 = vadd.f32 %v758, %v760
      %957 = vadd.xlane.f32.xlu0 %v956
      %v958 = vpop.xlane.xlu0 %957
      %v959 = vadd.f32 %v764, %v766
      %960 = vadd.xlane.f32.xlu0 %v959
      %v961 = vpop.xlane.xlu0 %960
      %v962 = vadd.f32 %v770, %v772
      %963 = vadd.xlane.f32.xlu0 %v962
      %v964 = vpop.xlane.xlu0 %963
      %v965 = vadd.f32 %v776, %v778
      %966 = vadd.xlane.f32.xlu0 %v965
      %v967 = vpop.xlane.xlu0 %966
      %v968 = vadd.f32 %v782, %v784
      %969 = vadd.xlane.f32.xlu0 %v968
      %v970 = vpop.xlane.xlu0 %969
      %v971 = vadd.f32 %v788, %v790
      %972 = vadd.xlane.f32.xlu0 %v971
      %v973 = vpop.xlane.xlu0 %972
      %v974 = vadd.f32 %v794, %v796
      %975 = vadd.xlane.f32.xlu0 %v974
      %v976 = vpop.xlane.xlu0 %975
      %v977 = vadd.f32 %v800, %v802
      %978 = vadd.xlane.f32.xlu0 %v977
      %v979 = vpop.xlane.xlu0 %978
      %v980 = vmul.f32 %v710, %v710
      %v981 = vmul.f32 %v712, %v712
      %v982 = vmul.f32 %v716, %v716
      %v983 = vmul.f32 %v718, %v718
      %v984 = vmul.f32 %v722, %v722
      %v985 = vmul.f32 %v724, %v724
      %v986 = vmul.f32 %v728, %v728
      %v987 = vmul.f32 %v730, %v730
      %v988 = vmul.f32 %v734, %v734
      %v989 = vmul.f32 %v736, %v736
      %v990 = vmul.f32 %v740, %v740
      %v991 = vmul.f32 %v742, %v742
      %v992 = vmul.f32 %v746, %v746
      %v993 = vmul.f32 %v748, %v748
      %v994 = vmul.f32 %v752, %v752
      %v995 = vmul.f32 %v754, %v754
      %v996 = vmul.f32 %v758, %v758
      %v997 = vmul.f32 %v760, %v760
      %v998 = vmul.f32 %v764, %v764
      %v999 = vmul.f32 %v766, %v766
      %v1000 = vmul.f32 %v770, %v770
      %v1001 = vmul.f32 %v772, %v772
      %v1002 = vmul.f32 %v776, %v776
      %v1003 = vmul.f32 %v778, %v778
      %v1004 = vmul.f32 %v782, %v782
      %v1005 = vmul.f32 %v784, %v784
      %v1006 = vmul.f32 %v788, %v788
      %v1007 = vmul.f32 %v790, %v790
      %v1008 = vmul.f32 %v794, %v794
      %v1009 = vmul.f32 %v796, %v796
      %v1010 = vmul.f32 %v800, %v800
      %v1011 = vmul.f32 %v802, %v802
      %v1012 = vadd.f32 %v980, %v981
      %1013 = vadd.xlane.f32.xlu0 %v1012
      %v1014 = vpop.xlane.xlu0 %1013
      %v1015 = vadd.f32 %v982, %v983
      %1016 = vadd.xlane.f32.xlu0 %v1015
      %v1017 = vpop.xlane.xlu0 %1016
      %v1018 = vadd.f32 %v984, %v985
      %1019 = vadd.xlane.f32.xlu0 %v1018
      %v1020 = vpop.xlane.xlu0 %1019
      %v1021 = vadd.f32 %v986, %v987
      %1022 = vadd.xlane.f32.xlu0 %v1021
      %v1023 = vpop.xlane.xlu0 %1022
      %v1024 = vadd.f32 %v988, %v989
      %1025 = vadd.xlane.f32.xlu0 %v1024
      %v1026 = vpop.xlane.xlu0 %1025
      %v1027 = vadd.f32 %v990, %v991
      %1028 = vadd.xlane.f32.xlu0 %v1027
      %v1029 = vpop.xlane.xlu0 %1028
      %v1030 = vadd.f32 %v992, %v993
      %1031 = vadd.xlane.f32.xlu0 %v1030
      %v1032 = vpop.xlane.xlu0 %1031
      %v1033 = vadd.f32 %v994, %v995
      %1034 = vadd.xlane.f32.xlu0 %v1033
      %v1035 = vpop.xlane.xlu0 %1034
      %v1036 = vadd.f32 %v996, %v997
      %1037 = vadd.xlane.f32.xlu0 %v1036
      %v1038 = vpop.xlane.xlu0 %1037
      %v1039 = vadd.f32 %v998, %v999
      %1040 = vadd.xlane.f32.xlu0 %v1039
      %v1041 = vpop.xlane.xlu0 %1040
      %v1042 = vadd.f32 %v1000, %v1001
      %1043 = vadd.xlane.f32.xlu0 %v1042
      %v1044 = vpop.xlane.xlu0 %1043
      %v1045 = vadd.f32 %v1002, %v1003
      %1046 = vadd.xlane.f32.xlu0 %v1045
      %v1047 = vpop.xlane.xlu0 %1046
      %v1048 = vadd.f32 %v1004, %v1005
      %1049 = vadd.xlane.f32.xlu0 %v1048
      %v1050 = vpop.xlane.xlu0 %1049
      %v1051 = vadd.f32 %v1006, %v1007
      %1052 = vadd.xlane.f32.xlu0 %v1051
      %v1053 = vpop.xlane.xlu0 %1052
      %v1054 = vadd.f32 %v1008, %v1009
      %1055 = vadd.xlane.f32.xlu0 %v1054
      %v1056 = vpop.xlane.xlu0 %1055
      %v1057 = vadd.f32 %v1010, %v1011
      %1058 = vadd.xlane.f32.xlu0 %v1057
      %v1059 = vpop.xlane.xlu0 %1058
      %v1060 = vld [vmem:[%s7] sm:$0xff]
      %v1061 = vld [vmem:[%s7 + $0x8] sm:$0xff]
      %v1062 = vld [vmem:[%s7 + $0x10] sm:$0xff]
      %v1063 = vld [vmem:[%s7 + $0x18] sm:$0xff]
      %vm1064 = vcmask 7168
      %v1065 = vsel %vm1064, %v934, %v1014
      %v1066 = vsel %vm1064, %v937, %v1017
      %v1067 = vsel %vm1064, %v940, %v1020
      %v1068 = vsel %vm1064, %v943, %v1023
      %v1069 = vsel %vm1064, %v946, %v1026
      %v1070 = vsel %vm1064, %v949, %v1029
      %v1071 = vsel %vm1064, %v952, %v1032
      %v1072 = vsel %vm1064, %v955, %v1035
      %v1073 = vsel %vm1064, %v958, %v1038
      %v1074 = vsel %vm1064, %v961, %v1041
      %v1075 = vsel %vm1064, %v964, %v1044
      %v1076 = vsel %vm1064, %v967, %v1047
      %v1077 = vsel %vm1064, %v970, %v1050
      %v1078 = vsel %vm1064, %v973, %v1053
      %v1079 = vsel %vm1064, %v976, %v1056
      %v1080 = vsel %vm1064, %v979, %v1059
      %1081 = vmatprep.subr.mxu0 0.0
      %1082 = vmatpush1.msra.mxu0 %v1065
      %1083 = vmatprep.subr.mxu0 0.0
      %1084 = vmatpush1.msra.mxu0 %v1066
      %1085 = vmatprep.subr.mxu0 0.0
      %1086 = vmatpush1.msra.mxu0 %v1067
      %1087 = vmatprep.subr.mxu0 0.0
      %1088 = vmatpush1.msra.mxu0 %v1068
      %1089 = vmatprep.subr.mxu0 0.0
      %1090 = vmatpush1.msra.mxu0 %v1069
      %1091 = vmatprep.subr.mxu0 0.0
      %1092 = vmatpush1.msra.mxu0 %v1070
      %1093 = vmatprep.subr.mxu0 0.0
      %1094 = vmatpush1.msra.mxu0 %v1071
      %1095 = vmatprep.subr.mxu0 0.0
      %1096 = vmatpush1.msra.mxu0 %v1072
      %1097 = vmatprep.subr.mxu0 0.0
      %1098 = vmatpush1.msra.mxu0 %v1073
      %1099 = vmatprep.subr.mxu0 0.0
      %1100 = vmatpush1.msra.mxu0 %v1074
      %1101 = vmatprep.subr.mxu0 0.0
      %1102 = vmatpush1.msra.mxu0 %v1075
      %1103 = vmatprep.subr.mxu0 0.0
      %1104 = vmatpush1.msra.mxu0 %v1076
      %1105 = vmatprep.subr.mxu0 0.0
      %1106 = vmatpush1.msra.mxu0 %v1077
      %1107 = vmatprep.subr.mxu0 0.0
      %1108 = vmatpush1.msra.mxu0 %v1078
      %1109 = vmatprep.subr.mxu0 0.0
      %1110 = vmatpush1.msra.mxu0 %v1079
      %1111 = vmatprep.subr.mxu0 0.0
      %1112 = vmatpush1.msra.mxu0 %v1080
      %1113 = vmatprep.subr.mxu0 0.0
      %1114 = vmatpush1.msra.mxu0 0.0
      %1115 = vmatprep.subr.mxu0 0.0
      %1116 = vmatpush1.msra.mxu0 0.0
      %1117 = vmatprep.subr.mxu0 0.0
      %1118 = vmatpush1.msra.mxu0 0.0
      %1119 = vmatprep.subr.mxu0 0.0
      %1120 = vmatpush1.msra.mxu0 0.0
      %1121 = vmatprep.subr.mxu0 0.0
      %1122 = vmatpush1.msra.mxu0 0.0
      %1123 = vmatprep.subr.mxu0 0.0
      %1124 = vmatpush1.msra.mxu0 0.0
      %1125 = vmatprep.subr.mxu0 0.0
      %1126 = vmatpush1.msra.mxu0 0.0
      %1127 = vmatprep.subr.mxu0 0.0
      %1128 = vmatpush1.msra.mxu0 0.0
      %1129 = vmatprep.subr.mxu0 0.0
      %1130 = vmatpush1.msra.mxu0 0.0
      %1131 = vmatprep.subr.mxu0 0.0
      %1132 = vmatpush1.msra.mxu0 0.0
      %1133 = vmatprep.subr.mxu0 0.0
      %1134 = vmatpush1.msra.mxu0 0.0
      %1135 = vmatprep.subr.mxu0 0.0
      %1136 = vmatpush1.msra.mxu0 0.0
      %1137 = vmatprep.subr.mxu0 0.0
      %1138 = vmatpush1.msra.mxu0 0.0
      %1139 = vmatprep.subr.mxu0 0.0
      %1140 = vmatpush1.msra.mxu0 0.0
      %1141 = vmatprep.subr.mxu0 0.0
      %1142 = vmatpush1.msra.mxu0 0.0
      %1143 = vmatprep.subr.mxu0 0.0
      %1144 = vmatpush1.msra.mxu0 0.0
      %1145 = vmatprep.mubr.f32.mxu0 0.0
      %1146 = vmatmul.mubr.f32.gmra.mrb[0].mxu0 %v1060
      %v1147 = vpop.f32.mrb[0].mxu0
      %v1148 = vadd.f32 0.0, %v1147
      %v1149 = vpop.f32.mrb[0].mxu0
      %1150 = vmatprep.mubr.f32.mxu0 0.0
      %1151 = vmatmul.mubr.f32.gmra.mrb[0].mxu0 %v1061
      %v1152 = vpop.f32.mrb[0].mxu0
      %v1153 = vadd.f32 0.0, %v1152
      %v1154 = vpop.f32.mrb[0].mxu0
      %1155 = vmatprep.mubr.f32.mxu0 0.0
      %1156 = vmatmul.mubr.f32.gmra.mrb[0].mxu0 %v1062
      %v1157 = vpop.f32.mrb[0].mxu0
      %v1158 = vadd.f32 0.0, %v1157
      %v1159 = vpop.f32.mrb[0].mxu0
      %1160 = vmatprep.mubr.f32.mxu0 0.0
      %1161 = vmatmul.mubr.f32.gmra.mrb[0].mxu0 %v1063
      %v1162 = vpop.f32.mrb[0].mxu0
      %v1163 = vadd.f32 0.0, %v1162
      %v1164 = vpop.f32.mrb[0].mxu0
      %1165 = vdwg.mxu0
      %v1166 = vmul.f32 %v1148, 0.0009765625
      %v1167 = vmul.f32 %v1153, 0.0009765625
      %v1168 = vmul.f32 %v1158, 0.0009765625
      %v1169 = vmul.f32 %v1163, 0.0009765625
      %v1170 = vmul.f32 %v1166, %v1166
      %v1171 = vmul.f32 %v1167, %v1167
      %v1172 = vmul.f32 %v1168, %v1168
      %v1173 = vmul.f32 %v1169, %v1169
      %1178 = vrot.lane.b32.xlu0 %v1170, 1
      %v1179 = vpop.permute.xlu0 %1178
      %1180 = vrot.lane.b32.xlu0 %v1171, 1
      %v1181 = vpop.permute.xlu0 %1180
      %1182 = vrot.lane.b32.xlu0 %v1172, 1
      %v1183 = vpop.permute.xlu0 %1182
      %1184 = vrot.lane.b32.xlu0 %v1173, 1
      %v1185 = vpop.permute.xlu0 %1184
      %v1190 = vsub.f32 %v1166, %v1179
      %v1191 = vsub.f32 %v1167, %v1181
      %v1192 = vsub.f32 %v1168, %v1183
      %v1193 = vsub.f32 %v1169, %v1185
      %v1194 = vmax.f32 %v1190, 0.0
      %v1195 = vmax.f32 %v1191, 0.0
      %v1196 = vmax.f32 %v1192, 0.0
      %v1197 = vmax.f32 %v1193, 0.0
      %v1198 = vadd.f32 %v1194, 1e-05
      %v1199 = vadd.f32 %v1195, 1e-05
      %v1200 = vadd.f32 %v1196, 1e-05
      %v1201 = vadd.f32 %v1197, 1e-05
      %v1202 = vrsqrt.pop %v1198
      %v1203 = vrsqrt.pop %v1199
      %v1204 = vrsqrt.pop %v1200
      %v1205 = vrsqrt.pop %v1201
      %v1206 = vld [vmem:[%s6] sm:$0xff]
      %v1207 = vld [vmem:[%s6 + $0x8] sm:$0xff]
      %v1208 = vld [vmem:[%s6 + $0x10] sm:$0xff]
      %v1209 = vld [vmem:[%s6 + $0x18] sm:$0xff]
      %v1210 = vld [vmem:[%s6 + $0x20] sm:$0xff]
      %v1211 = vld [vmem:[%s6 + $0x28] sm:$0xff]
      %v1212 = vld [vmem:[%s6 + $0x30] sm:$0xff]
      %v1213 = vld [vmem:[%s6 + $0x38] sm:$0xff]
      %v1214 = vld [vmem:[%s6 + $0x40] sm:$0xff]
      %v1215 = vld [vmem:[%s6 + $0x48] sm:$0xff]
      %v1216 = vld [vmem:[%s6 + $0x50] sm:$0xff]
      %v1217 = vld [vmem:[%s6 + $0x58] sm:$0xff]
      %v1218 = vld [vmem:[%s6 + $0x60] sm:$0xff]
      %v1219 = vld [vmem:[%s6 + $0x68] sm:$0xff]
      %v1220 = vld [vmem:[%s6 + $0x70] sm:$0xff]
      %v1221 = vld [vmem:[%s6 + $0x78] sm:$0xff]
      %v1222 = vsel %vm1064, %v1166, %v1202
      %v1223 = vsel %vm1064, %v1167, %v1203
      %v1224 = vsel %vm1064, %v1168, %v1204
      %v1225 = vsel %vm1064, %v1169, %v1205
      %vm1226 = vcmask 261120
      %v1228 = vsel %vm1226, %v1206, 0
      %v1231 = vsel %vm1226, %v1207, 0
      %v1234 = vsel %vm1226, %v1208, 0
      %v1237 = vsel %vm1226, %v1209, 0
      %v1240 = vsel %vm1226, %v1210, 0
      %v1243 = vsel %vm1226, %v1211, 0
      %v1246 = vsel %vm1226, %v1212, 0
      %v1249 = vsel %vm1226, %v1213, 0
      %v1252 = vsel %vm1226, %v1214, 0
      %v1255 = vsel %vm1226, %v1215, 0
      %v1258 = vsel %vm1226, %v1216, 0
      %v1261 = vsel %vm1226, %v1217, 0
      %v1264 = vsel %vm1226, %v1218, 0
      %v1267 = vsel %vm1226, %v1219, 0
      %v1270 = vsel %vm1226, %v1220, 0
      %v1273 = vsel %vm1226, %v1221, 0
      %1275 = vmatprep.subr.mxu0 0.0
      %1276 = vmatpush1.msra.mxu0 %v1222
      %1277 = vmatprep.subr.mxu0 0.0
      %1278 = vmatpush1.msra.mxu0 %v1223
      %1279 = vmatprep.subr.mxu0 0.0
      %1280 = vmatpush1.msra.mxu0 %v1224
      %1281 = vmatprep.subr.mxu0 0.0
      %1282 = vmatpush1.msra.mxu0 %v1225
      %1283 = vmatprep.subr.mxu0 0.0
      %1284 = vmatpush1.msra.mxu0 0.0
      %1285 = vmatprep.subr.mxu0 0.0
      %1286 = vmatpush1.msra.mxu0 0.0
      %1287 = vmatprep.subr.mxu0 0.0
      %1288 = vmatpush1.msra.mxu0 0.0
      %1289 = vmatprep.subr.mxu0 0.0
      %1290 = vmatpush1.msra.mxu0 0.0
      %1291 = vmatprep.subr.mxu0 0.0
      %1292 = vmatpush1.msra.mxu0 0.0
      %1293 = vmatprep.subr.mxu0 0.0
      %1294 = vmatpush1.msra.mxu0 0.0
      %1295 = vmatprep.subr.mxu0 0.0
      %1296 = vmatpush1.msra.mxu0 0.0
      %1297 = vmatprep.subr.mxu0 0.0
      %1298 = vmatpush1.msra.mxu0 0.0
      %1299 = vmatprep.subr.mxu0 0.0
      %1300 = vmatpush1.msra.mxu0 0.0
      %1301 = vmatprep.subr.mxu0 0.0
      %1302 = vmatpush1.msra.mxu0 0.0
      %1303 = vmatprep.subr.mxu0 0.0
      %1304 = vmatpush1.msra.mxu0 0.0
      %1305 = vmatprep.subr.mxu0 0.0
      %1306 = vmatpush1.msra.mxu0 0.0
      %1307 = vmatprep.subr.mxu0 0.0
      %1308 = vmatpush1.msra.mxu0 0.0
      %1309 = vmatprep.subr.mxu0 0.0
      %1310 = vmatpush1.msra.mxu0 0.0
      %1311 = vmatprep.subr.mxu0 0.0
      %1312 = vmatpush1.msra.mxu0 0.0
      %1313 = vmatprep.subr.mxu0 0.0
      %1314 = vmatpush1.msra.mxu0 0.0
      %1315 = vmatprep.subr.mxu0 0.0
      %1316 = vmatpush1.msra.mxu0 0.0
      %1317 = vmatprep.subr.mxu0 0.0
      %1318 = vmatpush1.msra.mxu0 0.0
      %1319 = vmatprep.subr.mxu0 0.0
      %1320 = vmatpush1.msra.mxu0 0.0
      %1321 = vmatprep.subr.mxu0 0.0
      %1322 = vmatpush1.msra.mxu0 0.0
      %1323 = vmatprep.subr.mxu0 0.0
      %1324 = vmatpush1.msra.mxu0 0.0
      %1325 = vmatprep.subr.mxu0 0.0
      %1326 = vmatpush1.msra.mxu0 0.0
      %1327 = vmatprep.subr.mxu0 0.0
      %1328 = vmatpush1.msra.mxu0 0.0
      %1329 = vmatprep.subr.mxu0 0.0
      %1330 = vmatpush1.msra.mxu0 0.0
      %1331 = vmatprep.subr.mxu0 0.0
      %1332 = vmatpush1.msra.mxu0 0.0
      %1333 = vmatprep.subr.mxu0 0.0
      %1334 = vmatpush1.msra.mxu0 0.0
      %1335 = vmatprep.subr.mxu0 0.0
      %1336 = vmatpush1.msra.mxu0 0.0
      %1337 = vmatprep.subr.mxu0 0.0
      %1338 = vmatpush1.msra.mxu0 0.0
      %1339 = vmatprep.mubr.f32.mxu0 0.0
      %1340 = vmatmul.mubr.f32.gmra.mrb[0].mxu0 %v1228
      %v1341 = vpop.f32.mrb[0].mxu0
      %v1342 = vadd.f32 0.0, %v1341
      %v1343 = vpop.f32.mrb[0].mxu0
      %1344 = vmatprep.mubr.f32.mxu0 0.0
      %1345 = vmatmul.mubr.f32.gmra.mrb[0].mxu0 %v1231
      %v1346 = vpop.f32.mrb[0].mxu0
      %v1347 = vadd.f32 0.0, %v1346
      %v1348 = vpop.f32.mrb[0].mxu0
      %1349 = vmatprep.mubr.f32.mxu0 0.0
      %1350 = vmatmul.mubr.f32.gmra.mrb[0].mxu0 %v1234
      %v1351 = vpop.f32.mrb[0].mxu0
      %v1352 = vadd.f32 0.0, %v1351
      %v1353 = vpop.f32.mrb[0].mxu0
      %1354 = vmatprep.mubr.f32.mxu0 0.0
      %1355 = vmatmul.mubr.f32.gmra.mrb[0].mxu0 %v1237
      %v1356 = vpop.f32.mrb[0].mxu0
      %v1357 = vadd.f32 0.0, %v1356
      %v1358 = vpop.f32.mrb[0].mxu0
      %1359 = vmatprep.mubr.f32.mxu0 0.0
      %1360 = vmatmul.mubr.f32.gmra.mrb[0].mxu0 %v1240
      %v1361 = vpop.f32.mrb[0].mxu0
      %v1362 = vadd.f32 0.0, %v1361
      %v1363 = vpop.f32.mrb[0].mxu0
      %1364 = vmatprep.mubr.f32.mxu0 0.0
      %1365 = vmatmul.mubr.f32.gmra.mrb[0].mxu0 %v1243
      %v1366 = vpop.f32.mrb[0].mxu0
      %v1367 = vadd.f32 0.0, %v1366
      %v1368 = vpop.f32.mrb[0].mxu0
      %1369 = vmatprep.mubr.f32.mxu0 0.0
      %1370 = vmatmul.mubr.f32.gmra.mrb[0].mxu0 %v1246
      %v1371 = vpop.f32.mrb[0].mxu0
      %v1372 = vadd.f32 0.0, %v1371
      %v1373 = vpop.f32.mrb[0].mxu0
      %1374 = vmatprep.mubr.f32.mxu0 0.0
      %1375 = vmatmul.mubr.f32.gmra.mrb[0].mxu0 %v1249
      %v1376 = vpop.f32.mrb[0].mxu0
      %v1377 = vadd.f32 0.0, %v1376
      %v1378 = vpop.f32.mrb[0].mxu0
      %1379 = vmatprep.mubr.f32.mxu0 0.0
      %1380 = vmatmul.mubr.f32.gmra.mrb[0].mxu0 %v1252
      %v1381 = vpop.f32.mrb[0].mxu0
      %v1382 = vadd.f32 0.0, %v1381
      %v1383 = vpop.f32.mrb[0].mxu0
      %1384 = vmatprep.mubr.f32.mxu0 0.0
      %1385 = vmatmul.mubr.f32.gmra.mrb[0].mxu0 %v1255
      %v1386 = vpop.f32.mrb[0].mxu0
      %v1387 = vadd.f32 0.0, %v1386
      %v1388 = vpop.f32.mrb[0].mxu0
      %1389 = vmatprep.mubr.f32.mxu0 0.0
      %1390 = vmatmul.mubr.f32.gmra.mrb[0].mxu0 %v1258
      %v1391 = vpop.f32.mrb[0].mxu0
      %v1392 = vadd.f32 0.0, %v1391
      %v1393 = vpop.f32.mrb[0].mxu0
      %1394 = vmatprep.mubr.f32.mxu0 0.0
      %1395 = vmatmul.mubr.f32.gmra.mrb[0].mxu0 %v1261
      %v1396 = vpop.f32.mrb[0].mxu0
      %v1397 = vadd.f32 0.0, %v1396
      %v1398 = vpop.f32.mrb[0].mxu0
      %1399 = vmatprep.mubr.f32.mxu0 0.0
      %1400 = vmatmul.mubr.f32.gmra.mrb[0].mxu0 %v1264
      %v1401 = vpop.f32.mrb[0].mxu0
      %v1402 = vadd.f32 0.0, %v1401
      %v1403 = vpop.f32.mrb[0].mxu0
      %1404 = vmatprep.mubr.f32.mxu0 0.0
      %1405 = vmatmul.mubr.f32.gmra.mrb[0].mxu0 %v1267
      %v1406 = vpop.f32.mrb[0].mxu0
      %v1407 = vadd.f32 0.0, %v1406
      %v1408 = vpop.f32.mrb[0].mxu0
      %1409 = vmatprep.mubr.f32.mxu0 0.0
      %1410 = vmatmul.mubr.f32.gmra.mrb[0].mxu0 %v1270
      %v1411 = vpop.f32.mrb[0].mxu0
      %v1412 = vadd.f32 0.0, %v1411
      %v1413 = vpop.f32.mrb[0].mxu0
      %1414 = vmatprep.mubr.f32.mxu0 0.0
      %1415 = vmatmul.mubr.f32.gmra.mrb[0].mxu0 %v1273
      %v1416 = vpop.f32.mrb[0].mxu0
      %v1417 = vadd.f32 0.0, %v1416
      %v1418 = vpop.f32.mrb[0].mxu0
      %1419 = vdwg.mxu0
      %v1420 = vld [vmem:[%s5] sm:$0xff]
      %v1421 = vld [vmem:[%s5 + $0x8] sm:$0xff]
      %v1422 = vld [vmem:[%s5 + $0x10] sm:$0xff]
      %v1423 = vld [vmem:[%s5 + $0x18] sm:$0xff]
      %v1424 = vld [vmem:[%s5 + $0x20] sm:$0xff]
      %v1425 = vld [vmem:[%s5 + $0x28] sm:$0xff]
      %v1426 = vld [vmem:[%s5 + $0x30] sm:$0xff]
      %v1427 = vld [vmem:[%s5 + $0x38] sm:$0xff]
      %v1428 = vld [vmem:[%s5 + $0x40] sm:$0xff]
      %v1429 = vld [vmem:[%s5 + $0x48] sm:$0xff]
      %v1430 = vld [vmem:[%s5 + $0x50] sm:$0xff]
      %v1431 = vld [vmem:[%s5 + $0x58] sm:$0xff]
      %v1432 = vld [vmem:[%s5 + $0x60] sm:$0xff]
      %v1433 = vld [vmem:[%s5 + $0x68] sm:$0xff]
      %v1434 = vld [vmem:[%s5 + $0x70] sm:$0xff]
      %v1435 = vld [vmem:[%s5 + $0x78] sm:$0xff]
      %1452 = vrot.lane.b32.xlu0 %v1420, 1
      %v1453 = vpop.permute.xlu0 %1452
      %1454 = vrot.lane.b32.xlu0 %v1421, 1
      %v1455 = vpop.permute.xlu0 %1454
      %1456 = vrot.lane.b32.xlu0 %v1422, 1
      %v1457 = vpop.permute.xlu0 %1456
      %1458 = vrot.lane.b32.xlu0 %v1423, 1
      %v1459 = vpop.permute.xlu0 %1458
      %1460 = vrot.lane.b32.xlu0 %v1424, 1
      %v1461 = vpop.permute.xlu0 %1460
      %1462 = vrot.lane.b32.xlu0 %v1425, 1
      %v1463 = vpop.permute.xlu0 %1462
      %1464 = vrot.lane.b32.xlu0 %v1426, 1
      %v1465 = vpop.permute.xlu0 %1464
      %1466 = vrot.lane.b32.xlu0 %v1427, 1
      %v1467 = vpop.permute.xlu0 %1466
      %1468 = vrot.lane.b32.xlu0 %v1428, 1
      %v1469 = vpop.permute.xlu0 %1468
      %1470 = vrot.lane.b32.xlu0 %v1429, 1
      %v1471 = vpop.permute.xlu0 %1470
      %1472 = vrot.lane.b32.xlu0 %v1430, 1
      %v1473 = vpop.permute.xlu0 %1472
      %1474 = vrot.lane.b32.xlu0 %v1431, 1
      %v1475 = vpop.permute.xlu0 %1474
      %1476 = vrot.lane.b32.xlu0 %v1432, 1
      %v1477 = vpop.permute.xlu0 %1476
      %1478 = vrot.lane.b32.xlu0 %v1433, 1
      %v1479 = vpop.permute.xlu0 %1478
      %1480 = vrot.lane.b32.xlu0 %v1434, 1
      %v1481 = vpop.permute.xlu0 %1480
      %1482 = vrot.lane.b32.xlu0 %v1435, 1
      %v1483 = vpop.permute.xlu0 %1482
      %v1500 = vmul.f32 %v1342, %v1453
      %v1501 = vmul.f32 %v1347, %v1455
      %v1502 = vmul.f32 %v1352, %v1457
      %v1503 = vmul.f32 %v1357, %v1459
      %v1504 = vmul.f32 %v1362, %v1461
      %v1505 = vmul.f32 %v1367, %v1463
      %v1506 = vmul.f32 %v1372, %v1465
      %v1507 = vmul.f32 %v1377, %v1467
      %v1508 = vmul.f32 %v1382, %v1469
      %v1509 = vmul.f32 %v1387, %v1471
      %v1510 = vmul.f32 %v1392, %v1473
      %v1511 = vmul.f32 %v1397, %v1475
      %v1512 = vmul.f32 %v1402, %v1477
      %v1513 = vmul.f32 %v1407, %v1479
      %v1514 = vmul.f32 %v1412, %v1481
      %v1515 = vmul.f32 %v1417, %v1483
      %1532 = vrot.lane.b32.xlu0 %v1500, 127
      %v1533 = vpop.permute.xlu0 %1532
      %1534 = vrot.lane.b32.xlu0 %v1501, 127
      %v1535 = vpop.permute.xlu0 %1534
      %1536 = vrot.lane.b32.xlu0 %v1502, 127
      %v1537 = vpop.permute.xlu0 %1536
      %1538 = vrot.lane.b32.xlu0 %v1503, 127
      %v1539 = vpop.permute.xlu0 %1538
      %1540 = vrot.lane.b32.xlu0 %v1504, 127
      %v1541 = vpop.permute.xlu0 %1540
      %1542 = vrot.lane.b32.xlu0 %v1505, 127
      %v1543 = vpop.permute.xlu0 %1542
      %1544 = vrot.lane.b32.xlu0 %v1506, 127
      %v1545 = vpop.permute.xlu0 %1544
      %1546 = vrot.lane.b32.xlu0 %v1507, 127
      %v1547 = vpop.permute.xlu0 %1546
      %1548 = vrot.lane.b32.xlu0 %v1508, 127
      %v1549 = vpop.permute.xlu0 %1548
      %1550 = vrot.lane.b32.xlu0 %v1509, 127
      %v1551 = vpop.permute.xlu0 %1550
      %1552 = vrot.lane.b32.xlu0 %v1510, 127
      %v1553 = vpop.permute.xlu0 %1552
      %1554 = vrot.lane.b32.xlu0 %v1511, 127
      %v1555 = vpop.permute.xlu0 %1554
      %1556 = vrot.lane.b32.xlu0 %v1512, 127
      %v1557 = vpop.permute.xlu0 %1556
      %1558 = vrot.lane.b32.xlu0 %v1513, 127
      %v1559 = vpop.permute.xlu0 %1558
      %1560 = vrot.lane.b32.xlu0 %v1514, 127
      %v1561 = vpop.permute.xlu0 %1560
      %1562 = vrot.lane.b32.xlu0 %v1515, 127
      %v1563 = vpop.permute.xlu0 %1562
      %v1580 = vmul.f32 %v1342, %v1533
      %v1581 = vmul.f32 %v1347, %v1535
      %v1582 = vmul.f32 %v1352, %v1537
      %v1583 = vmul.f32 %v1357, %v1539
      %v1584 = vmul.f32 %v1362, %v1541
      %v1585 = vmul.f32 %v1367, %v1543
      %v1586 = vmul.f32 %v1372, %v1545
      %v1587 = vmul.f32 %v1377, %v1547
      %v1588 = vmul.f32 %v1382, %v1549
      %v1589 = vmul.f32 %v1387, %v1551
      %v1590 = vmul.f32 %v1392, %v1553
      %v1591 = vmul.f32 %v1397, %v1555
      %v1592 = vmul.f32 %v1402, %v1557
      %v1593 = vmul.f32 %v1407, %v1559
      %v1594 = vmul.f32 %v1412, %v1561
      %v1595 = vmul.f32 %v1417, %v1563
      %1612 = vrot.lane.b32.xlu0 %v1580, 1
      %v1613 = vpop.permute.xlu0 %1612
      %1614 = vrot.lane.b32.xlu0 %v1581, 1
      %v1615 = vpop.permute.xlu0 %1614
      %1616 = vrot.lane.b32.xlu0 %v1582, 1
      %v1617 = vpop.permute.xlu0 %1616
      %1618 = vrot.lane.b32.xlu0 %v1583, 1
      %v1619 = vpop.permute.xlu0 %1618
      %1620 = vrot.lane.b32.xlu0 %v1584, 1
      %v1621 = vpop.permute.xlu0 %1620
      %1622 = vrot.lane.b32.xlu0 %v1585, 1
      %v1623 = vpop.permute.xlu0 %1622
      %1624 = vrot.lane.b32.xlu0 %v1586, 1
      %v1625 = vpop.permute.xlu0 %1624
      %1626 = vrot.lane.b32.xlu0 %v1587, 1
      %v1627 = vpop.permute.xlu0 %1626
      %1628 = vrot.lane.b32.xlu0 %v1588, 1
      %v1629 = vpop.permute.xlu0 %1628
      %1630 = vrot.lane.b32.xlu0 %v1589, 1
      %v1631 = vpop.permute.xlu0 %1630
      %1632 = vrot.lane.b32.xlu0 %v1590, 1
      %v1633 = vpop.permute.xlu0 %1632
      %1634 = vrot.lane.b32.xlu0 %v1591, 1
      %v1635 = vpop.permute.xlu0 %1634
      %1636 = vrot.lane.b32.xlu0 %v1592, 1
      %v1637 = vpop.permute.xlu0 %1636
      %1638 = vrot.lane.b32.xlu0 %v1593, 1
      %v1639 = vpop.permute.xlu0 %1638
      %1640 = vrot.lane.b32.xlu0 %v1594, 1
      %v1641 = vpop.permute.xlu0 %1640
      %1642 = vrot.lane.b32.xlu0 %v1595, 1
      %v1643 = vpop.permute.xlu0 %1642
      %v1660 = vsub.f32 %v1420, %v1613
      %v1661 = vsub.f32 %v1421, %v1615
      %v1662 = vsub.f32 %v1422, %v1617
      %v1663 = vsub.f32 %v1423, %v1619
      %v1664 = vsub.f32 %v1424, %v1621
      %v1665 = vsub.f32 %v1425, %v1623
      %v1666 = vsub.f32 %v1426, %v1625
      %v1667 = vsub.f32 %v1427, %v1627
      %v1668 = vsub.f32 %v1428, %v1629
      %v1669 = vsub.f32 %v1429, %v1631
      %v1670 = vsub.f32 %v1430, %v1633
      %v1671 = vsub.f32 %v1431, %v1635
      %v1672 = vsub.f32 %v1432, %v1637
      %v1673 = vsub.f32 %v1433, %v1639
      %v1674 = vsub.f32 %v1434, %v1641
      %v1675 = vsub.f32 %v1435, %v1643
      %1676 = vset.pattern.permute.xlu0 1
      %1677 = vperm.xlu0 %1676, %v1500
      %v1678 = vpop.permute.xlu0 %1677
      %1680 = vset.pattern.permute.xlu0 1
      %1681 = vperm.xlu0 %1680, %v1501
      %v1682 = vpop.permute.xlu0 %1681
      %1684 = vset.pattern.permute.xlu0 1
      %1685 = vperm.xlu0 %1684, %v1502
      %v1686 = vpop.permute.xlu0 %1685
      %1688 = vset.pattern.permute.xlu0 1
      %1689 = vperm.xlu0 %1688, %v1503
      %v1690 = vpop.permute.xlu0 %1689
      %1692 = vset.pattern.permute.xlu0 1
      %1693 = vperm.xlu0 %1692, %v1504
      %v1694 = vpop.permute.xlu0 %1693
      %1696 = vset.pattern.permute.xlu0 1
      %1697 = vperm.xlu0 %1696, %v1505
      %v1698 = vpop.permute.xlu0 %1697
      %1700 = vset.pattern.permute.xlu0 1
      %1701 = vperm.xlu0 %1700, %v1506
      %v1702 = vpop.permute.xlu0 %1701
      %1704 = vset.pattern.permute.xlu0 1
      %1705 = vperm.xlu0 %1704, %v1507
      %v1706 = vpop.permute.xlu0 %1705
      %1708 = vset.pattern.permute.xlu0 1
      %1709 = vperm.xlu0 %1708, %v1508
      %v1710 = vpop.permute.xlu0 %1709
      %1712 = vset.pattern.permute.xlu0 1
      %1713 = vperm.xlu0 %1712, %v1509
      %v1714 = vpop.permute.xlu0 %1713
      %1716 = vset.pattern.permute.xlu0 1
      %1717 = vperm.xlu0 %1716, %v1510
      %v1718 = vpop.permute.xlu0 %1717
      %1720 = vset.pattern.permute.xlu0 1
      %1721 = vperm.xlu0 %1720, %v1511
      %v1722 = vpop.permute.xlu0 %1721
      %1724 = vset.pattern.permute.xlu0 1
      %1725 = vperm.xlu0 %1724, %v1512
      %v1726 = vpop.permute.xlu0 %1725
      %1728 = vset.pattern.permute.xlu0 1
      %1729 = vperm.xlu0 %1728, %v1513
      %v1730 = vpop.permute.xlu0 %1729
      %1732 = vset.pattern.permute.xlu0 1
      %1733 = vperm.xlu0 %1732, %v1514
      %v1734 = vpop.permute.xlu0 %1733
      %1736 = vset.pattern.permute.xlu0 1
      %1737 = vperm.xlu0 %1736, %v1515
      %v1738 = vpop.permute.xlu0 %1737
      %v1740 = vmul.f32 %v710, %v1678
      %v1741 = vmul.f32 %v712, %v1678
      %v1742 = vmul.f32 %v716, %v1682
      %v1743 = vmul.f32 %v718, %v1682
      %v1744 = vmul.f32 %v722, %v1686
      %v1745 = vmul.f32 %v724, %v1686
      %v1746 = vmul.f32 %v728, %v1690
      %v1747 = vmul.f32 %v730, %v1690
      %v1748 = vmul.f32 %v734, %v1694
      %v1749 = vmul.f32 %v736, %v1694
      %v1750 = vmul.f32 %v740, %v1698
      %v1751 = vmul.f32 %v742, %v1698
      %v1752 = vmul.f32 %v746, %v1702
      %v1753 = vmul.f32 %v748, %v1702
      %v1754 = vmul.f32 %v752, %v1706
      %v1755 = vmul.f32 %v754, %v1706
      %v1756 = vmul.f32 %v758, %v1710
      %v1757 = vmul.f32 %v760, %v1710
      %v1758 = vmul.f32 %v764, %v1714
      %v1759 = vmul.f32 %v766, %v1714
      %v1760 = vmul.f32 %v770, %v1718
      %v1761 = vmul.f32 %v772, %v1718
      %v1762 = vmul.f32 %v776, %v1722
      %v1763 = vmul.f32 %v778, %v1722
      %v1764 = vmul.f32 %v782, %v1726
      %v1765 = vmul.f32 %v784, %v1726
      %v1766 = vmul.f32 %v788, %v1730
      %v1767 = vmul.f32 %v790, %v1730
      %v1768 = vmul.f32 %v794, %v1734
      %v1769 = vmul.f32 %v796, %v1734
      %v1770 = vmul.f32 %v800, %v1738
      %v1771 = vmul.f32 %v802, %v1738
      %1773 = vset.pattern.permute.xlu0 1
      %1774 = vperm.xlu0 %1773, %v1660
      %v1775 = vpop.permute.xlu0 %1774
      %1778 = vset.pattern.permute.xlu0 1
      %1779 = vperm.xlu0 %1778, %v1661
      %v1780 = vpop.permute.xlu0 %1779
      %1783 = vset.pattern.permute.xlu0 1
      %1784 = vperm.xlu0 %1783, %v1662
      %v1785 = vpop.permute.xlu0 %1784
      %1788 = vset.pattern.permute.xlu0 1
      %1789 = vperm.xlu0 %1788, %v1663
      %v1790 = vpop.permute.xlu0 %1789
      %1793 = vset.pattern.permute.xlu0 1
      %1794 = vperm.xlu0 %1793, %v1664
      %v1795 = vpop.permute.xlu0 %1794
      %1798 = vset.pattern.permute.xlu0 1
      %1799 = vperm.xlu0 %1798, %v1665
      %v1800 = vpop.permute.xlu0 %1799
      %1803 = vset.pattern.permute.xlu0 1
      %1804 = vperm.xlu0 %1803, %v1666
      %v1805 = vpop.permute.xlu0 %1804
      %1808 = vset.pattern.permute.xlu0 1
      %1809 = vperm.xlu0 %1808, %v1667
      %v1810 = vpop.permute.xlu0 %1809
      %1813 = vset.pattern.permute.xlu0 1
      %1814 = vperm.xlu0 %1813, %v1668
      %v1815 = vpop.permute.xlu0 %1814
      %1818 = vset.pattern.permute.xlu0 1
      %1819 = vperm.xlu0 %1818, %v1669
      %v1820 = vpop.permute.xlu0 %1819
      %1823 = vset.pattern.permute.xlu0 1
      %1824 = vperm.xlu0 %1823, %v1670
      %v1825 = vpop.permute.xlu0 %1824
      %1828 = vset.pattern.permute.xlu0 1
      %1829 = vperm.xlu0 %1828, %v1671
      %v1830 = vpop.permute.xlu0 %1829
      %1833 = vset.pattern.permute.xlu0 1
      %1834 = vperm.xlu0 %1833, %v1672
      %v1835 = vpop.permute.xlu0 %1834
      %1838 = vset.pattern.permute.xlu0 1
      %1839 = vperm.xlu0 %1838, %v1673
      %v1840 = vpop.permute.xlu0 %1839
      %1843 = vset.pattern.permute.xlu0 1
      %1844 = vperm.xlu0 %1843, %v1674
      %v1845 = vpop.permute.xlu0 %1844
      %1848 = vset.pattern.permute.xlu0 1
      %1849 = vperm.xlu0 %1848, %v1675
      %v1850 = vpop.permute.xlu0 %1849
      %v1852 = vadd.f32 %v1740, %v1775
      %v1853 = vadd.f32 %v1741, %v1775
      %v1854 = vadd.f32 %v1742, %v1780
      %v1855 = vadd.f32 %v1743, %v1780
      %v1856 = vadd.f32 %v1744, %v1785
      %v1857 = vadd.f32 %v1745, %v1785
      %v1858 = vadd.f32 %v1746, %v1790
      %v1859 = vadd.f32 %v1747, %v1790
      %v1860 = vadd.f32 %v1748, %v1795
      %v1861 = vadd.f32 %v1749, %v1795
      %v1862 = vadd.f32 %v1750, %v1800
      %v1863 = vadd.f32 %v1751, %v1800
      %v1864 = vadd.f32 %v1752, %v1805
      %v1865 = vadd.f32 %v1753, %v1805
      %v1866 = vadd.f32 %v1754, %v1810
      %v1867 = vadd.f32 %v1755, %v1810
      %v1868 = vadd.f32 %v1756, %v1815
      %v1869 = vadd.f32 %v1757, %v1815
      %v1870 = vadd.f32 %v1758, %v1820
      %v1871 = vadd.f32 %v1759, %v1820
      %v1872 = vadd.f32 %v1760, %v1825
      %v1873 = vadd.f32 %v1761, %v1825
      %v1874 = vadd.f32 %v1762, %v1830
      %v1875 = vadd.f32 %v1763, %v1830
      %v1876 = vadd.f32 %v1764, %v1835
      %v1877 = vadd.f32 %v1765, %v1835
      %v1878 = vadd.f32 %v1766, %v1840
      %v1879 = vadd.f32 %v1767, %v1840
      %v1880 = vadd.f32 %v1768, %v1845
      %v1881 = vadd.f32 %v1769, %v1845
      %v1882 = vadd.f32 %v1770, %v1850
      %v1883 = vadd.f32 %v1771, %v1850
      %v1884 = vadd.f32 %v1852, %v900
      %v1885 = vadd.f32 %v1853, %v901
      %v1886 = vadd.f32 %v1854, %v902
      %v1887 = vadd.f32 %v1855, %v903
      %v1888 = vadd.f32 %v1856, %v904
      %v1889 = vadd.f32 %v1857, %v905
      %v1890 = vadd.f32 %v1858, %v906
      %v1891 = vadd.f32 %v1859, %v907
      %v1892 = vadd.f32 %v1860, %v908
      %v1893 = vadd.f32 %v1861, %v909
      %v1894 = vadd.f32 %v1862, %v910
      %v1895 = vadd.f32 %v1863, %v911
      %v1896 = vadd.f32 %v1864, %v912
      %v1897 = vadd.f32 %v1865, %v913
      %v1898 = vadd.f32 %v1866, %v914
      %v1899 = vadd.f32 %v1867, %v915
      %v1900 = vadd.f32 %v1868, %v916
      %v1901 = vadd.f32 %v1869, %v917
      %v1902 = vadd.f32 %v1870, %v918
      %v1903 = vadd.f32 %v1871, %v919
      %v1904 = vadd.f32 %v1872, %v920
      %v1905 = vadd.f32 %v1873, %v921
      %v1906 = vadd.f32 %v1874, %v922
      %v1907 = vadd.f32 %v1875, %v923
      %v1908 = vadd.f32 %v1876, %v924
      %v1909 = vadd.f32 %v1877, %v925
      %v1910 = vadd.f32 %v1878, %v926
      %v1911 = vadd.f32 %v1879, %v927
      %v1912 = vadd.f32 %v1880, %v928
      %v1913 = vadd.f32 %v1881, %v929
      %v1914 = vadd.f32 %v1882, %v930
      %v1915 = vadd.f32 %v1883, %v931
      %v1916 = vmax.f32 %v1884, 0.0
      %v1917 = vmax.f32 %v1885, 0.0
      %v1918 = vmax.f32 %v1886, 0.0
      %v1919 = vmax.f32 %v1887, 0.0
      %v1920 = vmax.f32 %v1888, 0.0
      %v1921 = vmax.f32 %v1889, 0.0
      %v1922 = vmax.f32 %v1890, 0.0
      %v1923 = vmax.f32 %v1891, 0.0
      %v1924 = vmax.f32 %v1892, 0.0
      %v1925 = vmax.f32 %v1893, 0.0
      %v1926 = vmax.f32 %v1894, 0.0
      %v1927 = vmax.f32 %v1895, 0.0
      %v1928 = vmax.f32 %v1896, 0.0
      %v1929 = vmax.f32 %v1897, 0.0
      %v1930 = vmax.f32 %v1898, 0.0
      %v1931 = vmax.f32 %v1899, 0.0
      %v1932 = vmax.f32 %v1900, 0.0
      %v1933 = vmax.f32 %v1901, 0.0
      %v1934 = vmax.f32 %v1902, 0.0
      %v1935 = vmax.f32 %v1903, 0.0
      %v1936 = vmax.f32 %v1904, 0.0
      %v1937 = vmax.f32 %v1905, 0.0
      %v1938 = vmax.f32 %v1906, 0.0
      %v1939 = vmax.f32 %v1907, 0.0
      %v1940 = vmax.f32 %v1908, 0.0
      %v1941 = vmax.f32 %v1909, 0.0
      %v1942 = vmax.f32 %v1910, 0.0
      %v1943 = vmax.f32 %v1911, 0.0
      %v1944 = vmax.f32 %v1912, 0.0
      %v1945 = vmax.f32 %v1913, 0.0
      %v1946 = vmax.f32 %v1914, 0.0
      %v1947 = vmax.f32 %v1915, 0.0
      %v1948 = vld [vmem:[%s3] sm:$0xff]
      %v1949 = vld [vmem:[%s3 + $0x8] sm:$0xff]
      %v1950 = vld [vmem:[%s3 + $0x10] sm:$0xff]
      %v1951 = vld [vmem:[%s3 + $0x18] sm:$0xff]
      %v1952 = vld [vmem:[%s3 + $0x20] sm:$0xff]
      %v1953 = vld [vmem:[%s3 + $0x28] sm:$0xff]
      %v1954 = vld [vmem:[%s3 + $0x30] sm:$0xff]
      %v1955 = vld [vmem:[%s3 + $0x38] sm:$0xff]
      %v1956 = vld [vmem:[%s3 + $0x40] sm:$0xff]
      %v1957 = vld [vmem:[%s3 + $0x48] sm:$0xff]
      %v1958 = vld [vmem:[%s3 + $0x50] sm:$0xff]
      %v1959 = vld [vmem:[%s3 + $0x58] sm:$0xff]
      %v1960 = vld [vmem:[%s3 + $0x60] sm:$0xff]
      %v1961 = vld [vmem:[%s3 + $0x68] sm:$0xff]
      %v1962 = vld [vmem:[%s3 + $0x70] sm:$0xff]
      %v1963 = vld [vmem:[%s3 + $0x78] sm:$0xff]
      %v1964 = vld [vmem:[%s4] sm:$0xff]
      %v1965 = vld [vmem:[%s4 + $0x8] sm:$0xff]
      %v1966 = vld [vmem:[%s4 + $0x10] sm:$0xff]
      %v1967 = vld [vmem:[%s4 + $0x18] sm:$0xff]
      %v1968 = vld [vmem:[%s4 + $0x20] sm:$0xff]
      %v1969 = vld [vmem:[%s4 + $0x28] sm:$0xff]
      %v1970 = vld [vmem:[%s4 + $0x30] sm:$0xff]
      %v1971 = vld [vmem:[%s4 + $0x38] sm:$0xff]
      %v1972 = vld [vmem:[%s4 + $0x40] sm:$0xff]
      %v1973 = vld [vmem:[%s4 + $0x48] sm:$0xff]
      %v1974 = vld [vmem:[%s4 + $0x50] sm:$0xff]
      %v1975 = vld [vmem:[%s4 + $0x58] sm:$0xff]
      %v1976 = vld [vmem:[%s4 + $0x60] sm:$0xff]
      %v1977 = vld [vmem:[%s4 + $0x68] sm:$0xff]
      %v1978 = vld [vmem:[%s4 + $0x70] sm:$0xff]
      %v1979 = vld [vmem:[%s4 + $0x78] sm:$0xff]
      %1981 = vset.pattern.permute.xlu0 0
      %1982 = vperm.xlu0 %1981, %v1964
      %v1983 = vpop.permute.xlu0 %1982
      %1986 = vset.pattern.permute.xlu0 0
      %1987 = vperm.xlu0 %1986, %v1965
      %v1988 = vpop.permute.xlu0 %1987
      %1991 = vset.pattern.permute.xlu0 0
      %1992 = vperm.xlu0 %1991, %v1966
      %v1993 = vpop.permute.xlu0 %1992
      %1996 = vset.pattern.permute.xlu0 0
      %1997 = vperm.xlu0 %1996, %v1967
      %v1998 = vpop.permute.xlu0 %1997
      %2001 = vset.pattern.permute.xlu0 0
      %2002 = vperm.xlu0 %2001, %v1968
      %v2003 = vpop.permute.xlu0 %2002
      %2006 = vset.pattern.permute.xlu0 0
      %2007 = vperm.xlu0 %2006, %v1969
      %v2008 = vpop.permute.xlu0 %2007
      %2011 = vset.pattern.permute.xlu0 0
      %2012 = vperm.xlu0 %2011, %v1970
      %v2013 = vpop.permute.xlu0 %2012
      %2016 = vset.pattern.permute.xlu0 0
      %2017 = vperm.xlu0 %2016, %v1971
      %v2018 = vpop.permute.xlu0 %2017
      %2021 = vset.pattern.permute.xlu0 0
      %2022 = vperm.xlu0 %2021, %v1972
      %v2023 = vpop.permute.xlu0 %2022
      %2026 = vset.pattern.permute.xlu0 0
      %2027 = vperm.xlu0 %2026, %v1973
      %v2028 = vpop.permute.xlu0 %2027
      %2031 = vset.pattern.permute.xlu0 0
      %2032 = vperm.xlu0 %2031, %v1974
      %v2033 = vpop.permute.xlu0 %2032
      %2036 = vset.pattern.permute.xlu0 0
      %2037 = vperm.xlu0 %2036, %v1975
      %v2038 = vpop.permute.xlu0 %2037
      %2041 = vset.pattern.permute.xlu0 0
      %2042 = vperm.xlu0 %2041, %v1976
      %v2043 = vpop.permute.xlu0 %2042
      %2046 = vset.pattern.permute.xlu0 0
      %2047 = vperm.xlu0 %2046, %v1977
      %v2048 = vpop.permute.xlu0 %2047
      %2051 = vset.pattern.permute.xlu0 0
      %2052 = vperm.xlu0 %2051, %v1978
      %v2053 = vpop.permute.xlu0 %2052
      %2056 = vset.pattern.permute.xlu0 0
      %2057 = vperm.xlu0 %2056, %v1979
      %v2058 = vpop.permute.xlu0 %2057
      %2060 = vmatprep.subr.mxu0 %v1917
      %2061 = vmatpush1.msra.mxu0 %v1916
      %2062 = vmatprep.subr.mxu0 %v1919
      %2063 = vmatpush1.msra.mxu0 %v1918
      %2064 = vmatprep.subr.mxu0 %v1921
      %2065 = vmatpush1.msra.mxu0 %v1920
      %2066 = vmatprep.subr.mxu0 %v1923
      %2067 = vmatpush1.msra.mxu0 %v1922
      %2068 = vmatprep.subr.mxu0 %v1925
      %2069 = vmatpush1.msra.mxu0 %v1924
      %2070 = vmatprep.subr.mxu0 %v1927
      %2071 = vmatpush1.msra.mxu0 %v1926
      %2072 = vmatprep.subr.mxu0 %v1929
      %2073 = vmatpush1.msra.mxu0 %v1928
      %2074 = vmatprep.subr.mxu0 %v1931
      %2075 = vmatpush1.msra.mxu0 %v1930
      %2076 = vmatprep.subr.mxu0 %v1933
      %2077 = vmatpush1.msra.mxu0 %v1932
      %2078 = vmatprep.subr.mxu0 %v1935
      %2079 = vmatpush1.msra.mxu0 %v1934
      %2080 = vmatprep.subr.mxu0 %v1937
      %2081 = vmatpush1.msra.mxu0 %v1936
      %2082 = vmatprep.subr.mxu0 %v1939
      %2083 = vmatpush1.msra.mxu0 %v1938
      %2084 = vmatprep.subr.mxu0 %v1941
      %2085 = vmatpush1.msra.mxu0 %v1940
      %2086 = vmatprep.subr.mxu0 %v1943
      %2087 = vmatpush1.msra.mxu0 %v1942
      %2088 = vmatprep.subr.mxu0 %v1945
      %2089 = vmatpush1.msra.mxu0 %v1944
      %2090 = vmatprep.subr.mxu0 %v1947
      %2091 = vmatpush1.msra.mxu0 %v1946
      %2092 = vmatprep.subr.mxu0 0.0
      %2093 = vmatpush1.msra.mxu0 0.0
      %2094 = vmatprep.subr.mxu0 0.0
      %2095 = vmatpush1.msra.mxu0 0.0
      %2096 = vmatprep.subr.mxu0 0.0
      %2097 = vmatpush1.msra.mxu0 0.0
      %2098 = vmatprep.subr.mxu0 0.0
      %2099 = vmatpush1.msra.mxu0 0.0
      %2100 = vmatprep.subr.mxu0 0.0
      %2101 = vmatpush1.msra.mxu0 0.0
      %2102 = vmatprep.subr.mxu0 0.0
      %2103 = vmatpush1.msra.mxu0 0.0
      %2104 = vmatprep.subr.mxu0 0.0
      %2105 = vmatpush1.msra.mxu0 0.0
      %2106 = vmatprep.subr.mxu0 0.0
      %2107 = vmatpush1.msra.mxu0 0.0
      %2108 = vmatprep.subr.mxu0 0.0
      %2109 = vmatpush1.msra.mxu0 0.0
      %2110 = vmatprep.subr.mxu0 0.0
      %2111 = vmatpush1.msra.mxu0 0.0
      %2112 = vmatprep.subr.mxu0 0.0
      %2113 = vmatpush1.msra.mxu0 0.0
      %2114 = vmatprep.subr.mxu0 0.0
      %2115 = vmatpush1.msra.mxu0 0.0
      %2116 = vmatprep.subr.mxu0 0.0
      %2117 = vmatpush1.msra.mxu0 0.0
      %2118 = vmatprep.subr.mxu0 0.0
      %2119 = vmatpush1.msra.mxu0 0.0
      %2120 = vmatprep.subr.mxu0 0.0
      %2121 = vmatpush1.msra.mxu0 0.0
      %2122 = vmatprep.subr.mxu0 0.0
      %2123 = vmatpush1.msra.mxu0 0.0
      %2124 = vmatprep.mubr.f32.mxu0 0.0
      %2125 = vmatmul.mubr.f32.gmra.mrb[0].mxu0 %v1948
      %v2126 = vpop.f32.mrb[0].mxu0
      %v2127 = vadd.f32 %v1983, %v2126
      %v2128 = vpop.f32.mrb[0].mxu0
      %v2129 = vadd.f32 %v1983, %v2128
      %2130 = vmatprep.mubr.f32.mxu0 0.0
      %2131 = vmatmul.mubr.f32.gmra.mrb[0].mxu0 %v1949
      %v2132 = vpop.f32.mrb[0].mxu0
      %v2133 = vadd.f32 %v1988, %v2132
      %v2134 = vpop.f32.mrb[0].mxu0
      %v2135 = vadd.f32 %v1988, %v2134
      %2136 = vmatprep.mubr.f32.mxu0 0.0
      %2137 = vmatmul.mubr.f32.gmra.mrb[0].mxu0 %v1950
      %v2138 = vpop.f32.mrb[0].mxu0
      %v2139 = vadd.f32 %v1993, %v2138
      %v2140 = vpop.f32.mrb[0].mxu0
      %v2141 = vadd.f32 %v1993, %v2140
      %2142 = vmatprep.mubr.f32.mxu0 0.0
      %2143 = vmatmul.mubr.f32.gmra.mrb[0].mxu0 %v1951
      %v2144 = vpop.f32.mrb[0].mxu0
      %v2145 = vadd.f32 %v1998, %v2144
      %v2146 = vpop.f32.mrb[0].mxu0
      %v2147 = vadd.f32 %v1998, %v2146
      %2148 = vmatprep.mubr.f32.mxu0 0.0
      %2149 = vmatmul.mubr.f32.gmra.mrb[0].mxu0 %v1952
      %v2150 = vpop.f32.mrb[0].mxu0
      %v2151 = vadd.f32 %v2003, %v2150
      %v2152 = vpop.f32.mrb[0].mxu0
      %v2153 = vadd.f32 %v2003, %v2152
      %2154 = vmatprep.mubr.f32.mxu0 0.0
      %2155 = vmatmul.mubr.f32.gmra.mrb[0].mxu0 %v1953
      %v2156 = vpop.f32.mrb[0].mxu0
      %v2157 = vadd.f32 %v2008, %v2156
      %v2158 = vpop.f32.mrb[0].mxu0
      %v2159 = vadd.f32 %v2008, %v2158
      %2160 = vmatprep.mubr.f32.mxu0 0.0
      %2161 = vmatmul.mubr.f32.gmra.mrb[0].mxu0 %v1954
      %v2162 = vpop.f32.mrb[0].mxu0
      %v2163 = vadd.f32 %v2013, %v2162
      %v2164 = vpop.f32.mrb[0].mxu0
      %v2165 = vadd.f32 %v2013, %v2164
      %2166 = vmatprep.mubr.f32.mxu0 0.0
      %2167 = vmatmul.mubr.f32.gmra.mrb[0].mxu0 %v1955
      %v2168 = vpop.f32.mrb[0].mxu0
      %v2169 = vadd.f32 %v2018, %v2168
      %v2170 = vpop.f32.mrb[0].mxu0
      %v2171 = vadd.f32 %v2018, %v2170
      %2172 = vmatprep.mubr.f32.mxu0 0.0
      %2173 = vmatmul.mubr.f32.gmra.mrb[0].mxu0 %v1956
      %v2174 = vpop.f32.mrb[0].mxu0
      %v2175 = vadd.f32 %v2023, %v2174
      %v2176 = vpop.f32.mrb[0].mxu0
      %v2177 = vadd.f32 %v2023, %v2176
      %2178 = vmatprep.mubr.f32.mxu0 0.0
      %2179 = vmatmul.mubr.f32.gmra.mrb[0].mxu0 %v1957
      %v2180 = vpop.f32.mrb[0].mxu0
      %v2181 = vadd.f32 %v2028, %v2180
      %v2182 = vpop.f32.mrb[0].mxu0
      %v2183 = vadd.f32 %v2028, %v2182
      %2184 = vmatprep.mubr.f32.mxu0 0.0
      %2185 = vmatmul.mubr.f32.gmra.mrb[0].mxu0 %v1958
      %v2186 = vpop.f32.mrb[0].mxu0
      %v2187 = vadd.f32 %v2033, %v2186
      %v2188 = vpop.f32.mrb[0].mxu0
      %v2189 = vadd.f32 %v2033, %v2188
      %2190 = vmatprep.mubr.f32.mxu0 0.0
      %2191 = vmatmul.mubr.f32.gmra.mrb[0].mxu0 %v1959
      %v2192 = vpop.f32.mrb[0].mxu0
      %v2193 = vadd.f32 %v2038, %v2192
      %v2194 = vpop.f32.mrb[0].mxu0
      %v2195 = vadd.f32 %v2038, %v2194
      %2196 = vmatprep.mubr.f32.mxu0 0.0
      %2197 = vmatmul.mubr.f32.gmra.mrb[0].mxu0 %v1960
      %v2198 = vpop.f32.mrb[0].mxu0
      %v2199 = vadd.f32 %v2043, %v2198
      %v2200 = vpop.f32.mrb[0].mxu0
      %v2201 = vadd.f32 %v2043, %v2200
      %2202 = vmatprep.mubr.f32.mxu0 0.0
      %2203 = vmatmul.mubr.f32.gmra.mrb[0].mxu0 %v1961
      %v2204 = vpop.f32.mrb[0].mxu0
      %v2205 = vadd.f32 %v2048, %v2204
      %v2206 = vpop.f32.mrb[0].mxu0
      %v2207 = vadd.f32 %v2048, %v2206
      %2208 = vmatprep.mubr.f32.mxu0 0.0
      %2209 = vmatmul.mubr.f32.gmra.mrb[0].mxu0 %v1962
      %v2210 = vpop.f32.mrb[0].mxu0
      %v2211 = vadd.f32 %v2053, %v2210
      %v2212 = vpop.f32.mrb[0].mxu0
      %v2213 = vadd.f32 %v2053, %v2212
      %2214 = vmatprep.mubr.f32.mxu0 0.0
      %2215 = vmatmul.mubr.f32.gmra.mrb[0].mxu0 %v1963
      %v2216 = vpop.f32.mrb[0].mxu0
      %v2217 = vadd.f32 %v2058, %v2216
      %v2218 = vpop.f32.mrb[0].mxu0
      %v2219 = vadd.f32 %v2058, %v2218
      %2220 = vdwg.mxu0
      %2221 = vst [vmem:[%s305] sm:$0xff] %v2127
      %2222 = vst [vmem:[%s305 + $0x8] sm:$0xff] %v2129
      %2223 = vst [vmem:[%s305 + $0x10] sm:$0xff] %v2133
      %2224 = vst [vmem:[%s305 + $0x18] sm:$0xff] %v2135
      %2225 = vst [vmem:[%s305 + $0x20] sm:$0xff] %v2139
      %2226 = vst [vmem:[%s305 + $0x28] sm:$0xff] %v2141
      %2227 = vst [vmem:[%s305 + $0x30] sm:$0xff] %v2145
      %2228 = vst [vmem:[%s305 + $0x38] sm:$0xff] %v2147
      %2229 = vst [vmem:[%s305 + $0x40] sm:$0xff] %v2151
      %2230 = vst [vmem:[%s305 + $0x48] sm:$0xff] %v2153
      %2231 = vst [vmem:[%s305 + $0x50] sm:$0xff] %v2157
      %2232 = vst [vmem:[%s305 + $0x58] sm:$0xff] %v2159
      %2233 = vst [vmem:[%s305 + $0x60] sm:$0xff] %v2163
      %2234 = vst [vmem:[%s305 + $0x68] sm:$0xff] %v2165
      %2235 = vst [vmem:[%s305 + $0x70] sm:$0xff] %v2169
      %2236 = vst [vmem:[%s305 + $0x78] sm:$0xff] %v2171
      %2237 = vst [vmem:[%s305 + $0x80] sm:$0xff] %v2175
      %2238 = vst [vmem:[%s305 + $0x88] sm:$0xff] %v2177
      %2239 = vst [vmem:[%s305 + $0x90] sm:$0xff] %v2181
      %2240 = vst [vmem:[%s305 + $0x98] sm:$0xff] %v2183
      %2241 = vst [vmem:[%s305 + $0xa0] sm:$0xff] %v2187
      %2242 = vst [vmem:[%s305 + $0xa8] sm:$0xff] %v2189
      %2243 = vst [vmem:[%s305 + $0xb0] sm:$0xff] %v2193
      %2244 = vst [vmem:[%s305 + $0xb8] sm:$0xff] %v2195
      %2245 = vst [vmem:[%s305 + $0xc0] sm:$0xff] %v2199
      %2246 = vst [vmem:[%s305 + $0xc8] sm:$0xff] %v2201
      %2247 = vst [vmem:[%s305 + $0xd0] sm:$0xff] %v2205
      %2248 = vst [vmem:[%s305 + $0xd8] sm:$0xff] %v2207
      %2249 = vst [vmem:[%s305 + $0xe0] sm:$0xff] %v2211
      %2250 = vst [vmem:[%s305 + $0xe8] sm:$0xff] %v2213
      %2251 = vst [vmem:[%s305 + $0xf0] sm:$0xff] %v2217
      %2252 = vst [vmem:[%s305 + $0xf8] sm:$0xff] %v2219
      %p2253 = scmp.lt.s32.totalorder %s19, 1
      %s2254 = scalar_select %p2253, %s19, 1
      %s2255 = smul.addr %s2254, 32
      %s2256 = smul.addr %s2255, 8
      %s2257 = scalar_lea.vmem %s8, %s2256
      // Predicated region
      $region53: #{fused_forward.1} parent=51 // pred_check
        %p2258 = pneg %p210
      $region54: #{fused_forward.1} parent=51 // pred_check_branch
        %2260 = sbr.rel (%p2258) target = $region56
      $region55: #{fused_forward.1} parent=51 // pred_region
        _
      $region56: #{fused_forward.1} parent=51 // pred_fallthru
        _
    $region52: #{fused_forward.1} parent=5 // pred_fallthru
      _
    %p2261 = scmp.le.s32.totalorder 2, %s14
    // Predicated region
    $region57: #{fused_forward.1} parent=5 // pred_check
      %p2262 = pneg %p2261
    $region58: #{fused_forward.1} parent=5 // pred_check_branch
      %2264 = sbr.rel (%p2262) target = $region60
    $region59: #{fused_forward.1} parent=5 // pred_region
      %s2265 = ssub.s32 %s14, 2
      // Predicated region
      $region61: #{fused_forward.1} parent=59 // pred_check
        %p2266 = pneg %p216
      $region62: #{fused_forward.1} parent=59 // pred_check_branch
        %2268 = sbr.rel (%p2266) target = $region64
      $region63: #{fused_forward.1} parent=59 // pred_region
        %p2269 = scmp.lt.s32.totalorder %s20, 1
        %s2270 = scalar_select %p2269, %s20, 1
        %s2271 = smul.addr %s2270, 32
        %s2272 = smul.addr %s2271, 8
        %s2273 = scalar_lea.vmem %s8, %s2272
      $region64: #{fused_forward.1} parent=59 // pred_fallthru
        _
    $region60: #{fused_forward.1} parent=5 // pred_fallthru
      _
  $region6: #{fused_forward.1} parent=0 // loop_footer
    %s18 = sadd.s32 1, %s14
  $region7: #{fused_forward.1} parent=0 // loop_footer_branch
    %13 = sbr.rel target = $region3
  $region8: #{fused_forward.1} parent=0 // loop_exit
    _

</llo_original>
